<compile_context>
chip_gen: v7x
topology: tpu7x:2x2x1
jax: 0.10.0
libtpu: 0.0.40
codegen_flags: <defaults>
</compile_context>

<pallas_src>
import jax
import jax.numpy as jnp
from jax import lax
from jax.experimental import pallas as pl
from jax.experimental.pallas import tpu as pltpu

EPS = 1e-5  # nn.InstanceNorm2d default eps


# ---------------------------------------------------------------------------
# VMEM budgeting helpers (generation-aware)
# ---------------------------------------------------------------------------
def _vmem_capacity_bytes():
    try:
        return int(pltpu.get_tpu_info().vmem_capacity_bytes)
    except Exception:
        return 64 * 1024 * 1024  # v7x-safe fallback


def _conv_stage_vmem_bytes(sh, W, C):
    f32, bf16 = 4, 2
    est = 0
    est += 2 * f32 * sh * W * C              # double-buffered input strip (f32 worst case)
    est += 2 * 2 * f32 * W * C               # double-buffered top/bottom halo rows
    est += 2 * bf16 * sh * W * C             # double-buffered bf16 output strip
    est += 2 * bf16 * 9 * C * C              # folded bf16 weights
    est += (f32 + bf16) * (sh + 2) * W * C   # concat + (stage 2) normalized strip copy
    est += 2 * bf16 * (sh + 2) * W * C       # kw=0 / kw=2 tap temporaries
    est += bf16 * (sh + 2) * W * 3 * C       # shared im2col slab
    est += 2 * f32 * sh * W * C              # f32 accumulator + biased result
    est += 64 * f32 * C                      # bias / mean / rstd / stats rows
    return int(est)


def _residual_vmem_bytes(sh, W, C):
    f32, bf16 = 4, 2
    return int(2 * (f32 + bf16 + f32) * sh * W * C + 64 * f32 * C)


def _pick_strip_h(H, bytes_fn, budget_bytes, *, batch=1, min_total_steps=2):
    """Largest divisor of H whose estimated pipelined footprint fits the budget,
    while keeping enough grid steps that v7x's two TensorCores both get work."""
    divisors = [d for d in range(1, H + 1) if H % d == 0]
    fitting = [d for d in divisors if bytes_fn(d) <= budget_bytes] or [1]
    best = max(fitting)
    if batch * (H // best) < min_total_steps:
        ok = [d for d in fitting if batch * (H // d) >= min_total_steps]
        if ok:
            best = max(ok)
    return best


# ---------------------------------------------------------------------------
# Stage 1 & 2 kernel: [optional IN+ReLU] -> reflect-pad -> 3x3 conv -> stats
# ---------------------------------------------------------------------------
def _make_conv_stats_kernel(*, W, C, sh, normalize_input):
    def kernel(*refs):
        if normalize_input:
            (x_ref, top_ref, bot_ref, w_ref, b_ref, m_ref, r_ref,
             y_ref, st_ref) = refs
        else:
            x_ref, top_ref, bot_ref, w_ref, b_ref, y_ref, st_ref = refs

        # (sh+2, W, C): strip + ReflectionPad2d(1) halo rows.  All three pieces
        # arrive via auto-pipelined BlockSpecs (double-buffered DMA overlapped
        # with the previous strip's compute); the halo index_maps handle the
        # boundary reflection.
        xs = jnp.concatenate([top_ref[...], x_ref[...], bot_ref[...]], axis=0)

        if normalize_input:
            # IN1 normalize + ReLU preamble.  Per-image stats + elementwise op,
            # so applying it to the re-fetched halo rows too is correct.
            xs = jnp.maximum((xs.astype(jnp.float32) - m_ref[...]) * r_ref[...],
                             0.0)
        xs = xs.astype(jnp.bfloat16)                       # bf16 MXU operands

        # 3x3 conv with the kw taps folded into the contraction (K = 3*Cin).
        # The im2col slab is built once per strip; the three kh matmuls read
        # cheap leading-dim row windows of it.
        left = jnp.concatenate([xs[:, 1:2], xs[:, :W - 1]], axis=1)        # kw=0
        right = jnp.concatenate([xs[:, 1:W], xs[:, W - 2:W - 1]], axis=1)  # kw=2
        imcol = jnp.concatenate([left, xs, right], axis=-1)                # (sh+2, W, 3C)

        acc = None
        for dh in range(3):
            part = jnp.dot(imcol[dh:dh + sh].reshape(sh * W, 3 * C), w_ref[dh],
                           preferred_element_type=jnp.float32)
            acc = part if acc is None else acc + part
        y = acc.reshape(sh, W, C) + b_ref[...]             # (sh, W, C) f32

        y_ref[...] = y.astype(y_ref.dtype)                 # bf16 inter-stage store
        # One-pass InstanceNorm partials: per-channel sum and sum of squares
        # (kept in f32; reduced across strips in the wrapper).
        ssum = jnp.sum(y, axis=(0, 1)).reshape(1, C)
        ssq = jnp.sum(y * y, axis=(0, 1)).reshape(1, C)
        st_ref[...] = jnp.concatenate([ssum, ssq], axis=0)

    return kernel


def _conv_stage(x_img, w_folded, b_row, mean, rstd, *, sh, vmem_limit):
    """One conv (+ optional IN/ReLU preamble) over H-strips.

    Returns (conv output (N,H,W,C) bf16, per-strip stats (N, n_strips, 2, C) f32)."""
    N, H, W, C = x_img.shape
    n_strips = H // sh
    normalize_input = mean is not None
    kernel = _make_conv_stats_kernel(W=W, C=C, sh=sh,
                                     normalize_input=normalize_input)

    # ReflectionPad2d(1) halo rows, expressed purely in the index_maps so the
    # pipeline prefetches them like any other block.
    def top_map(n, s):
        return (n, jnp.abs(s * sh - 1), 0, 0)                      # s==0 -> row 1

    def bot_map(n, s):
        return (n, (H - 1) - jnp.abs((H - 1) - (s + 1) * sh), 0, 0)  # last -> H-2

    in_specs = [
        pl.BlockSpec((None, sh, W, C), lambda n, s: (n, s, 0, 0)),   # main strip
        pl.BlockSpec((None, 1, W, C), top_map),                      # top halo row
        pl.BlockSpec((None, 1, W, C), bot_map),                      # bottom halo row
        pl.BlockSpec((3, 3 * C, C), lambda n, s: (0, 0, 0)),         # folded bf16 weights
        pl.BlockSpec((1, C), lambda n, s: (0, 0)),                   # bias
    ]
    inputs = [x_img, x_img, x_img, w_folded, b_row]
    if normalize_input:
        in_specs += [pl.BlockSpec((None, 1, C), lambda n, s: (n, 0, 0)),
                     pl.BlockSpec((None, 1, C), lambda n, s: (n, 0, 0))]
        inputs += [mean.reshape(N, 1, C), rstd.reshape(N, 1, C)]

    y, st = pl.pallas_call(
        kernel,
        out_shape=(jax.ShapeDtypeStruct((N, H, W, C), jnp.bfloat16),
                   jax.ShapeDtypeStruct((N, n_strips, 2, C), jnp.float32)),
        grid_spec=pltpu.PrefetchScalarGridSpec(
            num_scalar_prefetch=0,
            grid=(N, n_strips),
            in_specs=in_specs,
            out_specs=(
                pl.BlockSpec((None, sh, W, C), lambda n, s: (n, s, 0, 0)),
                pl.BlockSpec((None, None, 2, C), lambda n, s: (n, s, 0, 0)),
            )),
        compiler_params=pltpu.CompilerParams(
            dimension_semantics=("parallel", "parallel"),
            vmem_limit_bytes=vmem_limit),
    )(*inputs)
    return y, st


# ---------------------------------------------------------------------------
# Stage 3 kernel: IN2 normalize + residual add (pure elementwise, strip-tiled)
# ---------------------------------------------------------------------------
def _residual_norm_kernel(x_ref, y_ref, m_ref, r_ref, o_ref):
    o_ref[...] = (x_ref[...] +
                  (y_ref[...].astype(jnp.float32) - m_ref[...]) * r_ref[...]
                  ).astype(o_ref.dtype)


def _residual_norm(x_img, y_img, mean, rstd, *, sh, vmem_limit):
    N, H, W, C = x_img.shape
    n_strips = H // sh
    return pl.pallas_call(
        _residual_norm_kernel,
        out_shape=jax.ShapeDtypeStruct((N, H, W, C), jnp.float32),
        grid_spec=pltpu.PrefetchScalarGridSpec(
            num_scalar_prefetch=0,
            grid=(N, n_strips),
            in_specs=[
                pl.BlockSpec((None, sh, W, C), lambda n, s: (n, s, 0, 0)),
                pl.BlockSpec((None, sh, W, C), lambda n, s: (n, s, 0, 0)),
                pl.BlockSpec((None, 1, C), lambda n, s: (n, 0, 0)),
                pl.BlockSpec((None, 1, C), lambda n, s: (n, 0, 0)),
            ],
            out_specs=pl.BlockSpec((None, sh, W, C), lambda n, s: (n, s, 0, 0)),
        ),
        compiler_params=pltpu.CompilerParams(
            dimension_semantics=("parallel", "parallel"),
            vmem_limit_bytes=vmem_limit),
    )(x_img, y_img, mean.reshape(N, 1, C), rstd.reshape(N, 1, C))


# ---------------------------------------------------------------------------
# Wrapper (NCHW in / NCHW out, PyTorch OIHW conv weights)
# ---------------------------------------------------------------------------
def _fold_weight(w_oihw):
    """OIHW (Cout, Cin, 3, 3) -> (kh, kw*Cin, Cout) bf16 with K ordered (kw, cin)."""
    w = jnp.transpose(w_oihw, (2, 3, 1, 0))          # (kh, kw, Cin, Cout)
    kh, kw, cin, cout = w.shape
    return w.reshape(kh, kw * cin, cout).astype(jnp.bfloat16)


def _finalize_stats(partials, count):
    tot = jnp.sum(partials, axis=1)                  # (N, 2, C)
    mean = tot[:, 0] / count
    # One-pass E[y^2]-mean^2 can go slightly negative from f32 cancellation.
    var = jnp.maximum(tot[:, 1] / count - mean * mean, 0.0)
    rstd = lax.rsqrt(var + EPS)
    return mean, rstd


def resnet_block(x_nchw, w1, b1, w2, b2, *, strip_h=None):
    N, C, H, W = x_nchw.shape
    x = jnp.transpose(x_nchw, (0, 2, 3, 1)).astype(jnp.float32)   # NHWC, C on lanes
    # NOTE: for tiny C (like this test) the lane dim is underutilized; at the
    # real GlobalGenerator resnet stage (C=256/512) C-on-lanes is lane-dense.

    capacity = _vmem_capacity_bytes()
    strip_budget = int(0.45 * capacity)     # headroom for double-buffering / 2 TCs on v7x
    vmem_limit = int(min(100 * 1024 * 1024, max(32 * 1024 * 1024, 0.75 * capacity)))

    if strip_h is None:
        strip_h = _pick_strip_h(H, lambda d: _conv_stage_vmem_bytes(d, W, C),
                                strip_budget, batch=N)
    if H % strip_h != 0:
        raise ValueError(f"strip_h={strip_h} must divide H={H}")
    # Stage 3 is pure elementwise / HBM-bound: give it its own (larger) strip.
    strip_h3 = _pick_strip_h(H, lambda d: _residual_vmem_bytes(d, W, C),
                             strip_budget, batch=N)

    w1k, w2k = _fold_weight(w1), _fold_weight(w2)
    b1k = b1.reshape(1, C).astype(jnp.float32)
    b2k = b2.reshape(1, C).astype(jnp.float32)

    # stage 1: conv1 + IN1 partial stats (y1 stored bf16 in HBM)
    y1, st1 = _conv_stage(x, w1k, b1k, None, None, sh=strip_h, vmem_limit=vmem_limit)
    m1, r1 = _finalize_stats(st1, H * W)
    # stage 2: IN1 normalize + ReLU + conv2 + IN2 partial stats (y2 stored bf16)
    y2, st2 = _conv_stage(y1, w2k, b2k, m1, r1, sh=strip_h, vmem_limit=vmem_limit)
    m2, r2 = _finalize_stats(st2, H * W)
    # stage 3: IN2 normalize + residual add
    # TODO(synk): when chaining the 9 GlobalGenerator blocks, fuse this stage
    # into the next block's stage-1 preamble so the sum never round-trips HBM.
    out = _residual_norm(x, y2, m2, r2, sh=strip_h3, vmem_limit=vmem_limit)

    return jnp.transpose(out, (0, 3, 1, 2)).astype(x_nchw.dtype)


# ---------------------------------------------------------------------------
# Pure-JAX reference (NCHW, f32) for correctness check
# ---------------------------------------------------------------------------
def resnet_block_ref(x, w1, b1, w2, b2):
    def conv(x, w, b):
        xp = jnp.pad(x, ((0, 0), (0, 0), (1, 1), (1, 1)), mode="reflect")
        y = lax.conv_general_dilated(
            xp, w, window_strides=(1, 1), padding="VALID",
            dimension_numbers=("NCHW", "OIHW", "NCHW"))
        return y + b[None, :, None, None]

    def inorm(y):
        m = jnp.mean(y, axis=(2, 3), keepdims=True)
        v = jnp.mean((y - m) ** 2, axis=(2, 3), keepdims=True)
        return (y - m) * lax.rsqrt(v + EPS)

    y = jnp.maximum(inorm(conv(x, w1, b1)), 0.0)
    y = inorm(conv(y, w2, b2))
    return x + y


if __name__ == "__main__":
    N, C, H, W = 2, 4, 16, 16  # dim = 4
    key = jax.random.PRNGKey(0)
    kx, kw1, kb1, kw2, kb2 = jax.random.split(key, 5)

    x = jax.random.normal(kx, (N, C, H, W), dtype=jnp.float32)
    # Conv2d(dim, dim, kernel_size=3) weights in PyTorch OIHW layout.
    w1 = 0.1 * jax.random.normal(kw1, (C, C, 3, 3), dtype=jnp.float32)
    b1 = 0.1 * jax.random.normal(kb1, (C,), dtype=jnp.float32)
    w2 = 0.1 * jax.random.normal(kw2, (C, C, 3, 3), dtype=jnp.float32)
    b2 = 0.1 * jax.random.normal(kb2, (C,), dtype=jnp.float32)

    # strip_h=8 -> 2 H-strips per image: exercises both the boundary (reflected)
    # and interior halo-row index_map paths of the conv kernels.
    out = jax.block_until_ready(resnet_block(x, w1, b1, w2, b2, strip_h=8))
    ref = jax.block_until_ready(resnet_block_ref(x, w1, b1, w2, b2))

    assert out.shape == (N, C, H, W)
    assert bool(jnp.all(jnp.isfinite(out)))
    err = float(jnp.max(jnp.abs(out - ref)))
    # bf16 matmul operands + bf16 inter-stage activations => looser tolerance
    # than the pure-f32 reference.
    assert err < 5e-2, err

    print("KERNEL_OK")
</pallas_src>

<mosaic_0001>
module attributes {stable_mosaic.version = 11 : i64} {
  func.func @kernel(%arg0: i32, %arg1: i32, %arg2: memref<1x8x16x4xf32, #tpu.memory_space<vmem>>, %arg3: memref<1x1x16x4xf32, #tpu.memory_space<vmem>>, %arg4: memref<1x1x16x4xf32, #tpu.memory_space<vmem>>, %arg5: memref<3x12x4xbf16, #tpu.memory_space<vmem>>, %arg6: memref<1x4xf32, #tpu.memory_space<vmem>>, %arg7: memref<1x8x16x4xbf16, #tpu.memory_space<vmem>>, %arg8: memref<1x1x2x4xf32, #tpu.memory_space<vmem>>) attributes {dimension_semantics = [#tpu.dimension_semantics<parallel>, #tpu.dimension_semantics<parallel>], iteration_bounds = array<i64: 2, 2>, scalar_prefetch = 0 : i64, scratch_operands = 0 : i64, tpu.core_type = #tpu.core_type<tc>, window_params = [{transform_indices = @transform_0, window_bounds = array<i64: 1, 8, 16, 4>}, {transform_indices = @transform_1, window_bounds = array<i64: 1, 1, 16, 4>}, {transform_indices = @transform_2, window_bounds = array<i64: 1, 1, 16, 4>}, {pipeline_mode = #tpu.pipeline_mode<synchronous>, transform_indices = @transform_3, window_bounds = array<i64: 3, 12, 4>}, {pipeline_mode = #tpu.pipeline_mode<synchronous>, transform_indices = @transform_4, window_bounds = array<i64: 1, 4>}, {transform_indices = @transform_5, window_bounds = array<i64: 1, 8, 16, 4>}, {transform_indices = @transform_6, window_bounds = array<i64: 1, 1, 2, 4>}]} {
    %c0 = arith.constant 0 : index
    %c0_0 = arith.constant 0 : index
    %c0_1 = arith.constant 0 : index
    %c0_2 = arith.constant 0 : index
    %0 = vector.load %arg3[%c0, %c0_0, %c0_1, %c0_2] : memref<1x1x16x4xf32, #tpu.memory_space<vmem>>, vector<1x1x16x4xf32>
    %1 = vector.shape_cast %0 : vector<1x1x16x4xf32> to vector<1x16x4xf32>
    %c0_3 = arith.constant 0 : index
    %c0_4 = arith.constant 0 : index
    %c0_5 = arith.constant 0 : index
    %c0_6 = arith.constant 0 : index
    %2 = vector.load %arg2[%c0_3, %c0_4, %c0_5, %c0_6] : memref<1x8x16x4xf32, #tpu.memory_space<vmem>>, vector<1x8x16x4xf32>
    %3 = vector.shape_cast %2 : vector<1x8x16x4xf32> to vector<8x16x4xf32>
    %c0_7 = arith.constant 0 : index
    %c0_8 = arith.constant 0 : index
    %c0_9 = arith.constant 0 : index
    %c0_10 = arith.constant 0 : index
    %4 = vector.load %arg4[%c0_7, %c0_8, %c0_9, %c0_10] : memref<1x1x16x4xf32, #tpu.memory_space<vmem>>, vector<1x1x16x4xf32>
    %5 = vector.shape_cast %4 : vector<1x1x16x4xf32> to vector<1x16x4xf32>
    %6 = tpu.concatenate %1, %3, %5 in 0 : vector<1x16x4xf32>, vector<8x16x4xf32>, vector<1x16x4xf32> -> vector<10x16x4xf32>
    %7 = arith.truncf %6 : vector<10x16x4xf32> to vector<10x16x4xbf16>
    %8 = vector.extract_strided_slice %7 {offsets = [0, 1, 0], sizes = [10, 1, 4], strides = [1, 1, 1]} : vector<10x16x4xbf16> to vector<10x1x4xbf16>
    %9 = vector.extract_strided_slice %7 {offsets = [0, 0, 0], sizes = [10, 15, 4], strides = [1, 1, 1]} : vector<10x16x4xbf16> to vector<10x15x4xbf16>
    %10 = tpu.concatenate %8, %9 in 1 : vector<10x1x4xbf16>, vector<10x15x4xbf16> -> vector<10x16x4xbf16>
    %11 = vector.extract_strided_slice %7 {offsets = [0, 1, 0], sizes = [10, 15, 4], strides = [1, 1, 1]} : vector<10x16x4xbf16> to vector<10x15x4xbf16>
    %12 = vector.extract_strided_slice %7 {offsets = [0, 14, 0], sizes = [10, 1, 4], strides = [1, 1, 1]} : vector<10x16x4xbf16> to vector<10x1x4xbf16>
    %13 = tpu.concatenate %11, %12 in 1 : vector<10x15x4xbf16>, vector<10x1x4xbf16> -> vector<10x16x4xbf16>
    %14 = tpu.concatenate %10, %7, %13 in 2 : vector<10x16x4xbf16>, vector<10x16x4xbf16>, vector<10x16x4xbf16> -> vector<10x16x12xbf16>
    %15 = vector.extract_strided_slice %14 {offsets = [0, 0, 0], sizes = [8, 16, 12], strides = [1, 1, 1]} : vector<10x16x12xbf16> to vector<8x16x12xbf16>
    %16 = vector.shape_cast %15 : vector<8x16x12xbf16> to vector<128x12xbf16>
    %c0_11 = arith.constant 0 : index
    %c0_12 = arith.constant 0 : index
    %c0_13 = arith.constant 0 : index
    %17 = vector.load %arg5[%c0_11, %c0_12, %c0_13] : memref<3x12x4xbf16, #tpu.memory_space<vmem>>, vector<1x12x4xbf16>
    %18 = vector.shape_cast %17 : vector<1x12x4xbf16> to vector<12x4xbf16>
    %cst = arith.constant dense<0.000000e+00> : vector<128x4xf32>
    %19 = tpu.matmul %16, %18, %cst {dimension_numbers = #tpu.dot_dimension_numbers<[1], [0], [0], [1], [0, 0, 1, 1], [], []>} : vector<128x12xbf16>, vector<12x4xbf16>, vector<128x4xf32> -> vector<128x4xf32>
    %20 = vector.extract_strided_slice %14 {offsets = [1, 0, 0], sizes = [8, 16, 12], strides = [1, 1, 1]} : vector<10x16x12xbf16> to vector<8x16x12xbf16>
    %21 = vector.shape_cast %20 : vector<8x16x12xbf16> to vector<128x12xbf16>
    %c1 = arith.constant 1 : index
    %c0_14 = arith.constant 0 : index
    %c0_15 = arith.constant 0 : index
    %22 = vector.load %arg5[%c1, %c0_14, %c0_15] : memref<3x12x4xbf16, #tpu.memory_space<vmem>>, vector<1x12x4xbf16>
    %23 = vector.shape_cast %22 : vector<1x12x4xbf16> to vector<12x4xbf16>
    %cst_16 = arith.constant dense<0.000000e+00> : vector<128x4xf32>
    %24 = tpu.matmul %21, %23, %cst_16 {dimension_numbers = #tpu.dot_dimension_numbers<[1], [0], [0], [1], [0, 0, 1, 1], [], []>} : vector<128x12xbf16>, vector<12x4xbf16>, vector<128x4xf32> -> vector<128x4xf32>
    %25 = arith.addf %19, %24 : vector<128x4xf32>
    %26 = vector.extract_strided_slice %14 {offsets = [2, 0, 0], sizes = [8, 16, 12], strides = [1, 1, 1]} : vector<10x16x12xbf16> to vector<8x16x12xbf16>
    %27 = vector.shape_cast %26 : vector<8x16x12xbf16> to vector<128x12xbf16>
    %c2 = arith.constant 2 : index
    %c0_17 = arith.constant 0 : index
    %c0_18 = arith.constant 0 : index
    %28 = vector.load %arg5[%c2, %c0_17, %c0_18] : memref<3x12x4xbf16, #tpu.memory_space<vmem>>, vector<1x12x4xbf16>
    %29 = vector.shape_cast %28 : vector<1x12x4xbf16> to vector<12x4xbf16>
    %cst_19 = arith.constant dense<0.000000e+00> : vector<128x4xf32>
    %30 = tpu.matmul %27, %29, %cst_19 {dimension_numbers = #tpu.dot_dimension_numbers<[1], [0], [0], [1], [0, 0, 1, 1], [], []>} : vector<128x12xbf16>, vector<12x4xbf16>, vector<128x4xf32> -> vector<128x4xf32>
    %31 = arith.addf %25, %30 : vector<128x4xf32>
    %32 = vector.shape_cast %31 : vector<128x4xf32> to vector<8x16x4xf32>
    %c0_20 = arith.constant 0 : index
    %c0_21 = arith.constant 0 : index
    %33 = vector.load %arg6[%c0_20, %c0_21] : memref<1x4xf32, #tpu.memory_space<vmem>>, vector<1x4xf32>
    %34 = vector.shape_cast %33 : vector<1x4xf32> to vector<1x1x4xf32>
    %35 = vector.broadcast %34 : vector<1x1x4xf32> to vector<8x16x4xf32>
    %36 = arith.addf %32, %35 : vector<8x16x4xf32>
    %37 = arith.truncf %36 : vector<8x16x4xf32> to vector<8x16x4xbf16>
    %c0_22 = arith.constant 0 : index
    %c0_23 = arith.constant 0 : index
    %c0_24 = arith.constant 0 : index
    %c0_25 = arith.constant 0 : index
    %38 = vector.load %arg7[%c0_22, %c0_23, %c0_24, %c0_25] : memref<1x8x16x4xbf16, #tpu.memory_space<vmem>>, vector<1x8x16x4xbf16>
    %39 = vector.shape_cast %38 : vector<1x8x16x4xbf16> to vector<8x16x4xbf16>
    %40 = vector.shape_cast %37 : vector<8x16x4xbf16> to vector<1x8x16x4xbf16>
    tpu.vector_store %arg7[%c0_22, %c0_23, %c0_24, %c0_25], %40 {strides = array<i32>} : memref<1x8x16x4xbf16, #tpu.memory_space<vmem>>, vector<1x8x16x4xbf16>,
    %cst_26 = arith.constant dense<0.000000e+00> : vector<4xf32>
    %41 = vector.multi_reduction <add>, %36, %cst_26 [0, 1] : vector<8x16x4xf32> to vector<4xf32>
    %42 = vector.shape_cast %41 : vector<4xf32> to vector<1x4xf32>
    %43 = arith.mulf %36, %36 : vector<8x16x4xf32>
    %cst_27 = arith.constant dense<0.000000e+00> : vector<4xf32>
    %44 = vector.multi_reduction <add>, %43, %cst_27 [0, 1] : vector<8x16x4xf32> to vector<4xf32>
    %45 = vector.shape_cast %44 : vector<4xf32> to vector<1x4xf32>
    %46 = tpu.concatenate %42, %45 in 0 : vector<1x4xf32>, vector<1x4xf32> -> vector<2x4xf32>
    %c0_28 = arith.constant 0 : index
    %c0_29 = arith.constant 0 : index
    %c0_30 = arith.constant 0 : index
    %c0_31 = arith.constant 0 : index
    %47 = vector.load %arg8[%c0_28, %c0_29, %c0_30, %c0_31] : memref<1x1x2x4xf32, #tpu.memory_space<vmem>>, vector<1x1x2x4xf32>
    %48 = vector.shape_cast %47 : vector<1x1x2x4xf32> to vector<2x4xf32>
    %49 = vector.shape_cast %46 : vector<2x4xf32> to vector<1x1x2x4xf32>
    tpu.vector_store %arg8[%c0_28, %c0_29, %c0_30, %c0_31], %49 {strides = array<i32>} : memref<1x1x2x4xf32, #tpu.memory_space<vmem>>, vector<1x1x2x4xf32>,
    return
  }
  func.func @transform_0(%arg0: i32, %arg1: i32) -> (i32, i32, i32, i32) {
    %c0_i32 = arith.constant 0 : i32
    %c0_i32_0 = arith.constant 0 : i32
    %c0_i32_1 = arith.constant 0 : i32
    return %arg0, %arg1, %c0_i32, %c0_i32_0 : i32, i32, i32, i32
  }
  func.func @transform_1(%arg0: i32, %arg1: i32) -> (i32, i32, i32, i32) {
    %c8_i32 = arith.constant 8 : i32
    %0 = arith.muli %arg1, %c8_i32 : i32
    %c1_i32 = arith.constant 1 : i32
    %1 = arith.subi %0, %c1_i32 : i32
    %2 = math.absi %1 : i32
    %c0_i32 = arith.constant 0 : i32
    %c0_i32_0 = arith.constant 0 : i32
    %c0_i32_1 = arith.constant 0 : i32
    return %arg0, %2, %c0_i32, %c0_i32_0 : i32, i32, i32, i32
  }
  func.func @transform_2(%arg0: i32, %arg1: i32) -> (i32, i32, i32, i32) {
    %c1_i32 = arith.constant 1 : i32
    %0 = arith.addi %arg1, %c1_i32 : i32
    %c8_i32 = arith.constant 8 : i32
    %1 = arith.muli %0, %c8_i32 : i32
    %c15_i32 = arith.constant 15 : i32
    %2 = arith.subi %c15_i32, %1 : i32
    %3 = math.absi %2 : i32
    %c15_i32_0 = arith.constant 15 : i32
    %4 = arith.subi %c15_i32_0, %3 : i32
    %c0_i32 = arith.constant 0 : i32
    %c0_i32_1 = arith.constant 0 : i32
    %c0_i32_2 = arith.constant 0 : i32
    return %arg0, %4, %c0_i32, %c0_i32_1 : i32, i32, i32, i32
  }
  func.func @transform_3(%arg0: i32, %arg1: i32) -> (i32, i32, i32) {
    %c0_i32 = arith.constant 0 : i32
    %c0_i32_0 = arith.constant 0 : i32
    %c0_i32_1 = arith.constant 0 : i32
    %c0_i32_2 = arith.constant 0 : i32
    return %c0_i32, %c0_i32_0, %c0_i32_1 : i32, i32, i32
  }
  func.func @transform_4(%arg0: i32, %arg1: i32) -> (i32, i32) {
    %c0_i32 = arith.constant 0 : i32
    %c0_i32_0 = arith.constant 0 : i32
    %c0_i32_1 = arith.constant 0 : i32
    return %c0_i32, %c0_i32_0 : i32, i32
  }
  func.func @transform_5(%arg0: i32, %arg1: i32) -> (i32, i32, i32, i32) {
    %c0_i32 = arith.constant 0 : i32
    %c0_i32_0 = arith.constant 0 : i32
    %c0_i32_1 = arith.constant 0 : i32
    return %arg0, %arg1, %c0_i32, %c0_i32_0 : i32, i32, i32, i32
  }
  func.func @transform_6(%arg0: i32, %arg1: i32) -> (i32, i32, i32, i32) {
    %c0_i32 = arith.constant 0 : i32
    %c0_i32_0 = arith.constant 0 : i32
    %c0_i32_1 = arith.constant 0 : i32
    return %arg0, %arg1, %c0_i32, %c0_i32_0 : i32, i32, i32, i32
  }
}

</mosaic_0001>

<llo_original>
// kernel: tpu_custom_call.1
$region0: #{tpu_custom_call.1}
  #allocation0 [shape = 'u32[]', space=smem, size = 0x4, offset = 0x4, fixed_abs, tag = 'smem constant byte address 0x4 - core index']
  #allocation1 [shape = 'u32[144,128]{1,0:T(1,128)}', space=vmem, size = 0x12000, scoped, tag = 'internal scratch']
  %s0 = inlined_call_operand.vmem [shape: f32[2,16,16,4], index: 0, kind: input, shape index: {}]
  %s1 = inlined_call_operand.vmem [shape: f32[2,16,16,4], index: 1, kind: input, shape index: {}]
  %s2 = inlined_call_operand.vmem [shape: f32[2,16,16,4], index: 2, kind: input, shape index: {}]
  %s3 = inlined_call_operand.vmem [shape: bf16[3,12,4], index: 3, kind: input, shape index: {}]
  %s4 = inlined_call_operand.vmem [shape: f32[1,4], index: 4, kind: input, shape index: {}]
  %s5 = inlined_call_operand.vmem [shape: bf16[2,16,16,4], index: 5, kind: output, shape index: {0}]
  %s6 = inlined_call_operand.hbm [shape: f32[2,2,2,4], index: 6, kind: output, shape index: {1}]
  %7 = xla_tuple %s5, %s6
  %s8 = sld [smem:[#allocation0]]
  $region61: #{tpu_custom_call.1} parent=0
    _
  %s10 = ssub.s32 1, %s8
  %s11 = scalar_select 0, %s10, %s8
  $region1: #{tpu_custom_call.1} parent=0
    #allocation2 [shape = 'u8[2048]{0}', space=vmem, size = 0x800, scoped, tag = 'output window, operand 1']
    #allocation3 [shape = 's32[2]{0}', space=sflag, size = 0x8, scoped, tag = 'scoped memory for tpu_custom_call.1']
    %12 = vsyncpa [#allocation3], 0
    %s13 = scalar_lea.sflag [#allocation3], 1
    %14 = vsyncpa %s13, 0
    loop: start=0, step=1, limit=6
    $region2: #{tpu_custom_call.1} parent=1 // loop_pre_header
      _
    $region3: #{tpu_custom_call.1} parent=1 // loop_header
      %s16 = sphi 0, %s20
      %p17 = scmp.ge.s32.totalorder %s16, 6
      %s23 = sphi 0, %s35
      %s24 = sphi 0, %s31
      %s25 = sphi 0, %s23
      %s26 = sphi 0, %s24
      %s27 = sphi 0, %s25
      %s28 = sphi 0, %s26
      %s40 = sphi 0, %s42
      %s43 = sphi 0, %s40
      %s44 = sphi 0, %s43
      %s60 = sphi 0, %s44
      %s78 = sphi 0, %s80
      %s81 = sphi 0, %s78
      %s82 = sphi 0, %s81
      %s98 = sphi 0, %s82
      %s120 = sphi 0, %s122
      %s123 = sphi 0, %s120
      %s124 = sphi 0, %s123
      %s140 = sphi 0, %s124
      %s144 = sphi 0, %s144
      %s146 = sphi 0, %s144
      %s147 = sphi 0, %s146
      %s161 = sphi 0, %s147
      %s165 = sphi 0, %s165
      %s167 = sphi 0, %s165
      %s168 = sphi 0, %s167
      %s182 = sphi 0, %s168
      %s190 = sphi 0, %s192
      %s193 = sphi 0, %s190
      %s194 = sphi 0, %s193
      %s210 = sphi 0, %s194
      %s218 = sphi 0, %s220
      %s221 = sphi 0, %s218
      %s222 = sphi 0, %s221
      %s238 = sphi 0, %s222
    $region4: #{tpu_custom_call.1} parent=1 // loop_header_branch
      %19 = sbr.rel (%p17) target = $region8
    $region5: #{tpu_custom_call.1} parent=1 // loop_body
      %s21 = ssub.s32 %s16, 1
      %s22 = ssub.s32 %s16, 2
      %s29 = sadd.s32 1, %s24
      %p30 = scmp.ge.s32.totalorder %s29, 2
      %s31 = scalar_select %p30, 0, %s29
      %s32 = sadd.s32 1, %s23
      %s33 = scalar_select %p30, %s32, %s23
      %p34 = scmp.ge.s32.totalorder %s33, 2
      %s35 = scalar_select %p34, 0, %s33
      %s36 = ssub.s32 %s23, %s35
      %s37 = ssub.s32 %s24, %s31
      %s38 = sor.u32 %s36, %s37
      %p39 = scmp.eq.s32.totalorder %s38, 0
      %s41 = sadd.s32 %s40, 1
      %s42 = scalar_select %p39, %s40, %s41
      %p45 = pneg %p39
      %p46 = scmp.eq.s32.totalorder %s16, 3
      %p47 = por %p45, %p46
      %p48 = scmp.ne.s32.totalorder %s40, %s43
      %p49 = scmp.eq.s32.totalorder %s16, 0
      %p50 = por %p48, %p49
      %p51 = scmp.ne.s32.totalorder %s40, %s43
      %p52 = scmp.eq.s32.totalorder %s21, 3
      %p53 = por %p51, %p52
      %p54 = scmp.ne.s32.totalorder %s43, %s44
      %p55 = scmp.eq.s32.totalorder %s21, 0
      %p56 = por %p54, %p55
      %p57 = scmp.ne.s32.totalorder %s43, %s44
      %p58 = scmp.eq.s32.totalorder %s22, 3
      %p59 = por %p57, %p58
      %p61 = scmp.ne.s32.totalorder %s44, %s60
      %p62 = scmp.eq.s32.totalorder %s22, 0
      %p63 = por %p61, %p62
      %s64 = smul.u32 %s24, 8
      %s65 = ssub.s32 %s64, 1
      %s66 = sshra.s32 %s65, 31
      %s67 = sadd.s32 %s65, %s66
      %s68 = sxor.u32 %s67, %s66
      %s69 = smul.u32 %s31, 8
      %s70 = ssub.s32 %s69, 1
      %s71 = sshra.s32 %s70, 31
      %s72 = sadd.s32 %s70, %s71
      %s73 = sxor.u32 %s72, %s71
      %s74 = ssub.s32 %s23, %s35
      %s75 = ssub.s32 %s68, %s73
      %s76 = sor.u32 %s74, %s75
      %p77 = scmp.eq.s32.totalorder %s76, 0
      %s79 = sadd.s32 %s78, 1
      %s80 = scalar_select %p77, %s78, %s79
      %p83 = pneg %p77
      %p84 = scmp.eq.s32.totalorder %s16, 3
      %p85 = por %p83, %p84
      %p86 = scmp.ne.s32.totalorder %s78, %s81
      %p87 = scmp.eq.s32.totalorder %s16, 0
      %p88 = por %p86, %p87
      %p89 = scmp.ne.s32.totalorder %s78, %s81
      %p90 = scmp.eq.s32.totalorder %s21, 3
      %p91 = por %p89, %p90
      %p92 = scmp.ne.s32.totalorder %s81, %s82
      %p93 = scmp.eq.s32.totalorder %s21, 0
      %p94 = por %p92, %p93
      %p95 = scmp.ne.s32.totalorder %s81, %s82
      %p96 = scmp.eq.s32.totalorder %s22, 3
      %p97 = por %p95, %p96
      %p99 = scmp.ne.s32.totalorder %s82, %s98
      %p100 = scmp.eq.s32.totalorder %s22, 0
      %p101 = por %p99, %p100
      %s102 = sadd.s32 %s24, 1
      %s103 = smul.u32 %s102, 8
      %s104 = ssub.s32 15, %s103
      %s105 = sshra.s32 %s104, 31
      %s106 = sadd.s32 %s104, %s105
      %s107 = sxor.u32 %s106, %s105
      %s108 = ssub.s32 15, %s107
      %s109 = sadd.s32 %s31, 1
      %s110 = smul.u32 %s109, 8
      %s111 = ssub.s32 15, %s110
      %s112 = sshra.s32 %s111, 31
      %s113 = sadd.s32 %s111, %s112
      %s114 = sxor.u32 %s113, %s112
      %s115 = ssub.s32 15, %s114
      %s116 = ssub.s32 %s23, %s35
      %s117 = ssub.s32 %s108, %s115
      %s118 = sor.u32 %s116, %s117
      %p119 = scmp.eq.s32.totalorder %s118, 0
      %s121 = sadd.s32 %s120, 1
      %s122 = scalar_select %p119, %s120, %s121
      %p125 = pneg %p119
      %p126 = scmp.eq.s32.totalorder %s16, 3
      %p127 = por %p125, %p126
      %p128 = scmp.ne.s32.totalorder %s120, %s123
      %p129 = scmp.eq.s32.totalorder %s16, 0
      %p130 = por %p128, %p129
      %p131 = scmp.ne.s32.totalorder %s120, %s123
      %p132 = scmp.eq.s32.totalorder %s21, 3
      %p133 = por %p131, %p132
      %p134 = scmp.ne.s32.totalorder %s123, %s124
      %p135 = scmp.eq.s32.totalorder %s21, 0
      %p136 = por %p134, %p135
      %p137 = scmp.ne.s32.totalorder %s123, %s124
      %p138 = scmp.eq.s32.totalorder %s22, 3
      %p139 = por %p137, %p138
      %p141 = scmp.ne.s32.totalorder %s124, %s140
      %p142 = scmp.eq.s32.totalorder %s22, 0
      %p143 = por %p141, %p142
      %s145 = sadd.s32 %s144, 1
      %p148 = scmp.eq.s32.totalorder %s16, 3
      %p149 = scmp.ne.s32.totalorder %s144, %s146
      %p150 = scmp.eq.s32.totalorder %s16, 0
      %p151 = por %p149, %p150
      %p152 = scmp.ne.s32.totalorder %s144, %s146
      %p153 = scmp.eq.s32.totalorder %s21, 3
      %p154 = por %p152, %p153
      %p155 = scmp.ne.s32.totalorder %s146, %s147
      %p156 = scmp.eq.s32.totalorder %s21, 0
      %p157 = por %p155, %p156
      %p158 = scmp.ne.s32.totalorder %s146, %s147
      %p159 = scmp.eq.s32.totalorder %s22, 3
      %p160 = por %p158, %p159
      %p162 = scmp.ne.s32.totalorder %s147, %s161
      %p163 = scmp.eq.s32.totalorder %s22, 0
      %p164 = por %p162, %p163
      %s166 = sadd.s32 %s165, 1
      %p169 = scmp.eq.s32.totalorder %s16, 3
      %p170 = scmp.ne.s32.totalorder %s165, %s167
      %p171 = scmp.eq.s32.totalorder %s16, 0
      %p172 = por %p170, %p171
      %p173 = scmp.ne.s32.totalorder %s165, %s167
      %p174 = scmp.eq.s32.totalorder %s21, 3
      %p175 = por %p173, %p174
      %p176 = scmp.ne.s32.totalorder %s167, %s168
      %p177 = scmp.eq.s32.totalorder %s21, 0
      %p178 = por %p176, %p177
      %p179 = scmp.ne.s32.totalorder %s167, %s168
      %p180 = scmp.eq.s32.totalorder %s22, 3
      %p181 = por %p179, %p180
      %p183 = scmp.ne.s32.totalorder %s168, %s182
      %p184 = scmp.eq.s32.totalorder %s22, 0
      %p185 = por %p183, %p184
      %s186 = ssub.s32 %s23, %s35
      %s187 = ssub.s32 %s24, %s31
      %s188 = sor.u32 %s186, %s187
      %p189 = scmp.eq.s32.totalorder %s188, 0
      %s191 = sadd.s32 %s190, 1
      %s192 = scalar_select %p189, %s190, %s191
      %p195 = pneg %p189
      %p196 = scmp.eq.s32.totalorder %s16, 3
      %p197 = por %p195, %p196
      %p198 = scmp.ne.s32.totalorder %s190, %s193
      %p199 = scmp.eq.s32.totalorder %s16, 0
      %p200 = por %p198, %p199
      %p201 = scmp.ne.s32.totalorder %s190, %s193
      %p202 = scmp.eq.s32.totalorder %s21, 3
      %p203 = por %p201, %p202
      %p204 = scmp.ne.s32.totalorder %s193, %s194
      %p205 = scmp.eq.s32.totalorder %s21, 0
      %p206 = por %p204, %p205
      %p207 = scmp.ne.s32.totalorder %s193, %s194
      %p208 = scmp.eq.s32.totalorder %s22, 3
      %p209 = por %p207, %p208
      %p211 = scmp.ne.s32.totalorder %s194, %s210
      %p212 = scmp.eq.s32.totalorder %s22, 0
      %p213 = por %p211, %p212
      %s214 = ssub.s32 %s23, %s35
      %s215 = ssub.s32 %s24, %s31
      %s216 = sor.u32 %s214, %s215
      %p217 = scmp.eq.s32.totalorder %s216, 0
      %s219 = sadd.s32 %s218, 1
      %s220 = scalar_select %p217, %s218, %s219
      %p223 = pneg %p217
      %p224 = scmp.eq.s32.totalorder %s16, 3
      %p225 = por %p223, %p224
      %p226 = scmp.ne.s32.totalorder %s218, %s221
      %p227 = scmp.eq.s32.totalorder %s16, 0
      %p228 = por %p226, %p227
      %p229 = scmp.ne.s32.totalorder %s218, %s221
      %p230 = scmp.eq.s32.totalorder %s21, 3
      %p231 = por %p229, %p230
      %p232 = scmp.ne.s32.totalorder %s221, %s222
      %p233 = scmp.eq.s32.totalorder %s21, 0
      %p234 = por %p232, %p233
      %p235 = scmp.ne.s32.totalorder %s221, %s222
      %p236 = scmp.eq.s32.totalorder %s22, 3
      %p237 = por %p235, %p236
      %p239 = scmp.ne.s32.totalorder %s222, %s238
      %p240 = scmp.eq.s32.totalorder %s22, 0
      %p241 = por %p239, %p240
      %p242 = scmp.le.s32.totalorder 1, %s16
      %p243 = scmp.lt.s32.totalorder %s16, 5
      %p244 = pnand %p242, %p243
      %p245 = pneg %p244
      // Predicated region
      $region9: #{tpu_custom_call.1} parent=5 // pred_check
        _
      $region10: #{tpu_custom_call.1} parent=5 // pred_check_branch
        %247 = sbr.rel (%p244) target = $region12
      $region11: #{tpu_custom_call.1} parent=5 // pred_region
        %s248 = ssub.s32 %s16, 1
        // Predicated region
        $region13: #{tpu_custom_call.1} parent=11 // pred_check
          %p249 = pneg %p157
        $region14: #{tpu_custom_call.1} parent=11 // pred_check_branch
          %251 = sbr.rel (%p249) target = $region16
        $region15: #{tpu_custom_call.1} parent=11 // pred_region
          _
        $region16: #{tpu_custom_call.1} parent=11 // pred_fallthru
          _
        // Predicated region
        $region17: #{tpu_custom_call.1} parent=11 // pred_check
          %p252 = pneg %p178
        $region18: #{tpu_custom_call.1} parent=11 // pred_check_branch
          %254 = sbr.rel (%p252) target = $region20
        $region19: #{tpu_custom_call.1} parent=11 // pred_region
          _
        $region20: #{tpu_custom_call.1} parent=11 // pred_fallthru
          _
      $region12: #{tpu_custom_call.1} parent=5 // pred_fallthru
        _
      %p255 = scmp.lt.s32.totalorder %s16, 4
      // Predicated region
      $region21: #{tpu_custom_call.1} parent=5 // pred_check
        %p256 = pneg %p255
      $region22: #{tpu_custom_call.1} parent=5 // pred_check_branch
        %258 = sbr.rel (%p256) target = $region24
      $region23: #{tpu_custom_call.1} parent=5 // pred_region
        // Predicated region
        $region25: #{tpu_custom_call.1} parent=23 // pred_check
          %p259 = pneg %p50
        $region26: #{tpu_custom_call.1} parent=23 // pred_check_branch
          %261 = sbr.rel (%p259) target = $region28
        $region27: #{tpu_custom_call.1} parent=23 // pred_region
          %s262 = smul.u32 8, %s24
          %p263 = scmp.lt.s32.totalorder %s23, 1
          %s264 = scalar_select %p263, %s23, 1
          %p265 = scmp.lt.s32.totalorder %s262, 15
          %s266 = scalar_select %p265, %s262, 15
          %s267 = smul.addr %s266, 2
          %s268 = smul.addr %s264, 32
          %s269 = sadd.s32 %s267, %s268
          %s270 = smul.addr %s269, 8
          %s271 = scalar_lea.vmem %s0, %s270
          %s272 = smul.u32 8, %s24
        $region28: #{tpu_custom_call.1} parent=23 // pred_fallthru
          _
        // Predicated region
        $region29: #{tpu_custom_call.1} parent=23 // pred_check
          %p273 = pneg %p88
        $region30: #{tpu_custom_call.1} parent=23 // pred_check_branch
          %275 = sbr.rel (%p273) target = $region32
        $region31: #{tpu_custom_call.1} parent=23 // pred_region
          %s276 = smul.u32 %s24, 8
          %s277 = ssub.s32 %s276, 1
          %s278 = sshra.s32 %s277, 31
          %s279 = sadd.s32 %s277, %s278
          %s280 = sxor.u32 %s279, %s278
          %p281 = scmp.lt.s32.totalorder %s23, 1
          %s282 = scalar_select %p281, %s23, 1
          %p283 = scmp.lt.s32.totalorder %s280, 15
          %s284 = scalar_select %p283, %s280, 15
          %s285 = smul.addr %s284, 2
          %s286 = smul.addr %s282, 32
          %s287 = sadd.s32 %s285, %s286
          %s288 = smul.addr %s287, 8
          %s289 = scalar_lea.vmem %s1, %s288
          %s290 = smul.u32 %s24, 8
          %s291 = ssub.s32 %s290, 1
          %s292 = sshra.s32 %s291, 31
          %s293 = sadd.s32 %s291, %s292
          %s294 = sxor.u32 %s293, %s292
        $region32: #{tpu_custom_call.1} parent=23 // pred_fallthru
          _
        // Predicated region
        $region33: #{tpu_custom_call.1} parent=23 // pred_check
          %p295 = pneg %p130
        $region34: #{tpu_custom_call.1} parent=23 // pred_check_branch
          %297 = sbr.rel (%p295) target = $region36
        $region35: #{tpu_custom_call.1} parent=23 // pred_region
          %s298 = sadd.s32 %s24, 1
          %s299 = smul.u32 %s298, 8
          %s300 = ssub.s32 15, %s299
          %s301 = sshra.s32 %s300, 31
          %s302 = sadd.s32 %s300, %s301
          %s303 = sxor.u32 %s302, %s301
          %s304 = ssub.s32 15, %s303
          %p305 = scmp.lt.s32.totalorder %s23, 1
          %s306 = scalar_select %p305, %s23, 1
          %p307 = scmp.lt.s32.totalorder %s304, 15
          %s308 = scalar_select %p307, %s304, 15
          %s309 = smul.addr %s308, 2
          %s310 = smul.addr %s306, 32
          %s311 = sadd.s32 %s309, %s310
          %s312 = smul.addr %s311, 8
          %s313 = scalar_lea.vmem %s2, %s312
          %s314 = sadd.s32 %s24, 1
          %s315 = smul.u32 %s314, 8
          %s316 = ssub.s32 15, %s315
          %s317 = sshra.s32 %s316, 31
          %s318 = sadd.s32 %s316, %s317
          %s319 = sxor.u32 %s318, %s317
          %s320 = ssub.s32 15, %s319
        $region36: #{tpu_custom_call.1} parent=23 // pred_fallthru
          _
      $region24: #{tpu_custom_call.1} parent=5 // pred_fallthru
        _
      %p321 = scmp.le.s32.totalorder 1, %s16
      %p322 = scmp.lt.s32.totalorder %s16, 5
      %p323 = pnand %p321, %p322
      %p324 = pneg %p323
      // Predicated region
      $region37: #{tpu_custom_call.1} parent=5 // pred_check
        _
      $region38: #{tpu_custom_call.1} parent=5 // pred_check_branch
        %326 = sbr.rel (%p323) target = $region40
      $region39: #{tpu_custom_call.1} parent=5 // pred_region
        %s327 = ssub.s32 %s16, 1
        %s328 = smul.u32 8, %s26
        %p329 = scmp.lt.s32.totalorder %s25, 1
        %s330 = scalar_select %p329, %s25, 1
        %p331 = scmp.lt.s32.totalorder %s328, 15
        %s332 = scalar_select %p331, %s328, 15
        %s333 = smul.addr %s332, 2
        %s334 = smul.addr %s330, 32
        %s335 = sadd.s32 %s333, %s334
        %s336 = smul.addr %s335, 8
        %s337 = scalar_lea.vmem %s0, %s336
        %p338 = pneg %p56
        %p339 = pneg %p53
        %s340 = smul.u32 %s26, 8
        %s341 = ssub.s32 %s340, 1
        %s342 = sshra.s32 %s341, 31
        %s343 = sadd.s32 %s341, %s342
        %s344 = sxor.u32 %s343, %s342
        %p345 = scmp.lt.s32.totalorder %s25, 1
        %s346 = scalar_select %p345, %s25, 1
        %p347 = scmp.lt.s32.totalorder %s344, 15
        %s348 = scalar_select %p347, %s344, 15
        %s349 = smul.addr %s348, 2
        %s350 = smul.addr %s346, 32
        %s351 = sadd.s32 %s349, %s350
        %s352 = smul.addr %s351, 8
        %s353 = scalar_lea.vmem %s1, %s352
        %p354 = pneg %p94
        %p355 = pneg %p91
        %s356 = sadd.s32 %s26, 1
        %s357 = smul.u32 %s356, 8
        %s358 = ssub.s32 15, %s357
        %s359 = sshra.s32 %s358, 31
        %s360 = sadd.s32 %s358, %s359
        %s361 = sxor.u32 %s360, %s359
        %s362 = ssub.s32 15, %s361
        %p363 = scmp.lt.s32.totalorder %s25, 1
        %s364 = scalar_select %p363, %s25, 1
        %p365 = scmp.lt.s32.totalorder %s362, 15
        %s366 = scalar_select %p365, %s362, 15
        %s367 = smul.addr %s366, 2
        %s368 = smul.addr %s364, 32
        %s369 = sadd.s32 %s367, %s368
        %s370 = smul.addr %s369, 8
        %s371 = scalar_lea.vmem %s2, %s370
        %p372 = pneg %p136
        %p373 = pneg %p133
        %p374 = pneg %p157
        %p375 = pneg %p154
        %p376 = pneg %p178
        %p377 = pneg %p175
        %p378 = pneg %p206
        %p379 = pneg %p203
        %s380 = smul.u32 8, %s26
        %p381 = scmp.lt.s32.totalorder %s25, 1
        %s382 = scalar_select %p381, %s25, 1
        %p383 = scmp.lt.s32.totalorder %s380, 15
        %s384 = scalar_select %p383, %s380, 15
        %s385 = smul.addr %s384, 2
        %s386 = smul.addr %s382, 32
        %s387 = sadd.s32 %s385, %s386
        %s388 = smul.addr %s387, 4
        %s389 = scalar_lea.vmem %s5, %s388
        %p390 = pneg %p234
        %p391 = pneg %p231
        %s392 = sand.u32 %s221, 1
        %s393 = scalar_lea.sflag [#allocation3], %s392
        %s394 = sand.u32 %s221, 1
        %s395 = smul.addr %s394, 2
        %s396 = scalar_lea.vmem [#allocation2], %s395
        %s397 = smul.u32 8, %s26
        %p398 = scmp.lt.s32.totalorder %s25, 1
        %s399 = scalar_select %p398, %s25, 1
        %p400 = scmp.lt.s32.totalorder %s397, 15
        %s401 = scalar_select %p400, %s397, 15
        %s402 = smul.addr %s401, 2
        %s403 = smul.addr %s399, 32
        %s404 = sadd.s32 %s402, %s403
        %s405 = smul.addr %s404, 8
        %s406 = scalar_lea.vmem %s0, %s405
        %s407 = smul.u32 8, %s26
        %s408 = smul.u32 %s26, 8
        %s409 = ssub.s32 %s408, 1
        %s410 = sshra.s32 %s409, 31
        %s411 = sadd.s32 %s409, %s410
        %s412 = sxor.u32 %s411, %s410
        %p413 = scmp.lt.s32.totalorder %s25, 1
        %s414 = scalar_select %p413, %s25, 1
        %p415 = scmp.lt.s32.totalorder %s412, 15
        %s416 = scalar_select %p415, %s412, 15
        %s417 = smul.addr %s416, 2
        %s418 = smul.addr %s414, 32
        %s419 = sadd.s32 %s417, %s418
        %s420 = smul.addr %s419, 8
        %s421 = scalar_lea.vmem %s1, %s420
        %s422 = smul.u32 %s26, 8
        %s423 = ssub.s32 %s422, 1
        %s424 = sshra.s32 %s423, 31
        %s425 = sadd.s32 %s423, %s424
        %s426 = sxor.u32 %s425, %s424
        %s427 = sadd.s32 %s26, 1
        %s428 = smul.u32 %s427, 8
        %s429 = ssub.s32 15, %s428
        %s430 = sshra.s32 %s429, 31
        %s431 = sadd.s32 %s429, %s430
        %s432 = sxor.u32 %s431, %s430
        %s433 = ssub.s32 15, %s432
        %p434 = scmp.lt.s32.totalorder %s25, 1
        %s435 = scalar_select %p434, %s25, 1
        %p436 = scmp.lt.s32.totalorder %s433, 15
        %s437 = scalar_select %p436, %s433, 15
        %s438 = smul.addr %s437, 2
        %s439 = smul.addr %s435, 32
        %s440 = sadd.s32 %s438, %s439
        %s441 = smul.addr %s440, 8
        %s442 = scalar_lea.vmem %s2, %s441
        %s443 = sadd.s32 %s26, 1
        %s444 = smul.u32 %s443, 8
        %s445 = ssub.s32 15, %s444
        %s446 = sshra.s32 %s445, 31
        %s447 = sadd.s32 %s445, %s446
        %s448 = sxor.u32 %s447, %s446
        %s449 = ssub.s32 15, %s448
        %s450 = smul.u32 8, %s26
        %p451 = scmp.lt.s32.totalorder %s25, 1
        %s452 = scalar_select %p451, %s25, 1
        %p453 = scmp.lt.s32.totalorder %s450, 15
        %s454 = scalar_select %p453, %s450, 15
        %s455 = smul.addr %s454, 2
        %s456 = smul.addr %s452, 32
        %s457 = sadd.s32 %s455, %s456
        %s458 = smul.addr %s457, 4
        %s459 = scalar_lea.vmem %s5, %s458
        %s460 = smul.u32 8, %s26
        %v462 = vld [vmem:[%s421] sm:$0xff]
        %v463 = vld [vmem:[%s421 + $0x8] sm:$0xff]
        %v464 = vld [vmem:[%s406] sm:$0xff]
        %v465 = vld [vmem:[%s406 + $0x8] sm:$0xff]
        %v466 = vld [vmem:[%s406 + $0x10] sm:$0xff]
        %v467 = vld [vmem:[%s406 + $0x18] sm:$0xff]
        %v468 = vld [vmem:[%s406 + $0x20] sm:$0xff]
        %v469 = vld [vmem:[%s406 + $0x28] sm:$0xff]
        %v470 = vld [vmem:[%s406 + $0x30] sm:$0xff]
        %v471 = vld [vmem:[%s406 + $0x38] sm:$0xff]
        %v472 = vld [vmem:[%s406 + $0x40] sm:$0xff]
        %v473 = vld [vmem:[%s406 + $0x48] sm:$0xff]
        %v474 = vld [vmem:[%s406 + $0x50] sm:$0xff]
        %v475 = vld [vmem:[%s406 + $0x58] sm:$0xff]
        %v476 = vld [vmem:[%s406 + $0x60] sm:$0xff]
        %v477 = vld [vmem:[%s406 + $0x68] sm:$0xff]
        %v478 = vld [vmem:[%s406 + $0x70] sm:$0xff]
        %v479 = vld [vmem:[%s406 + $0x78] sm:$0xff]
        %v480 = vld [vmem:[%s442] sm:$0xff]
        %v481 = vld [vmem:[%s442 + $0x8] sm:$0xff]
        %v482 = vpack.c.bf16 %v463, %v462
        %v483 = vpack.c.bf16 %v465, %v464
        %v484 = vpack.c.bf16 %v467, %v466
        %v485 = vpack.c.bf16 %v469, %v468
        %v486 = vpack.c.bf16 %v471, %v470
        %v487 = vpack.c.bf16 %v473, %v472
        %v488 = vpack.c.bf16 %v475, %v474
        %v489 = vpack.c.bf16 %v477, %v476
        %v490 = vpack.c.bf16 %v479, %v478
        %v491 = vpack.c.bf16 %v481, %v480
        %v493 = vshrl.u32 %v482, 16
        %v496 = vshrl.u32 %v483, 16
        %v499 = vshrl.u32 %v484, 16
        %v502 = vshrl.u32 %v485, 16
        %v505 = vshrl.u32 %v486, 16
        %v508 = vshrl.u32 %v487, 16
        %v511 = vshrl.u32 %v488, 16
        %v514 = vshrl.u32 %v489, 16
        %v517 = vshrl.u32 %v490, 16
        %v520 = vshrl.u32 %v491, 16
        %v532 = vrot.slane %v493, 7
        %v533 = vshll.u32 %v482, 16
        %v535 = vor.u32 %v532, %v533
        %v536 = vrot.slane %v496, 7
        %v537 = vshll.u32 %v483, 16
        %v539 = vor.u32 %v536, %v537
        %v540 = vrot.slane %v499, 7
        %v541 = vshll.u32 %v484, 16
        %v543 = vor.u32 %v540, %v541
        %v544 = vrot.slane %v502, 7
        %v545 = vshll.u32 %v485, 16
        %v547 = vor.u32 %v544, %v545
        %v548 = vrot.slane %v505, 7
        %v549 = vshll.u32 %v486, 16
        %v551 = vor.u32 %v548, %v549
        %v552 = vrot.slane %v508, 7
        %v553 = vshll.u32 %v487, 16
        %v555 = vor.u32 %v552, %v553
        %v556 = vrot.slane %v511, 7
        %v557 = vshll.u32 %v488, 16
        %v559 = vor.u32 %v556, %v557
        %v560 = vrot.slane %v514, 7
        %v561 = vshll.u32 %v489, 16
        %v563 = vor.u32 %v560, %v561
        %v564 = vrot.slane %v517, 7
        %v565 = vshll.u32 %v490, 16
        %v567 = vor.u32 %v564, %v565
        %v568 = vrot.slane %v520, 7
        %v569 = vshll.u32 %v491, 16
        %v571 = vor.u32 %v568, %v569
        %vm582 = vcmask 1040384
        %vm583 = vsmask.f32 256
        %vm584 = vmand %vm582, %vm583
        %v585 = vsel %vm584, %v493, %v535
        %v586 = vsel %vm584, %v496, %v539
        %v587 = vsel %vm584, %v499, %v543
        %v588 = vsel %vm584, %v502, %v547
        %v589 = vsel %vm584, %v505, %v551
        %v590 = vsel %vm584, %v508, %v555
        %v591 = vsel %vm584, %v511, %v559
        %v592 = vsel %vm584, %v514, %v563
        %v593 = vsel %vm584, %v517, %v567
        %v594 = vsel %vm584, %v520, %v571
        %v595 = vrot.slane %v533, 1
        %v596 = vor.u32 %v493, %v595
        %v597 = vrot.slane %v537, 1
        %v598 = vor.u32 %v496, %v597
        %v599 = vrot.slane %v541, 1
        %v600 = vor.u32 %v499, %v599
        %v601 = vrot.slane %v545, 1
        %v602 = vor.u32 %v502, %v601
        %v603 = vrot.slane %v549, 1
        %v604 = vor.u32 %v505, %v603
        %v605 = vrot.slane %v553, 1
        %v606 = vor.u32 %v508, %v605
        %v607 = vrot.slane %v557, 1
        %v608 = vor.u32 %v511, %v607
        %v609 = vrot.slane %v561, 1
        %v610 = vor.u32 %v514, %v609
        %v611 = vrot.slane %v565, 1
        %v612 = vor.u32 %v517, %v611
        %v613 = vrot.slane %v569, 1
        %v614 = vor.u32 %v520, %v613
        %vm635 = vcmask 1047552
        %vm636 = vsmask.f32 7424
        %vm637 = vmand %vm635, %vm636
        %v638 = vsel %vm637, %v596, %v533
        %v639 = vsel %vm637, %v598, %v537
        %v640 = vsel %vm637, %v600, %v541
        %v641 = vsel %vm637, %v602, %v545
        %v642 = vsel %vm637, %v604, %v549
        %v643 = vsel %vm637, %v606, %v553
        %v644 = vsel %vm637, %v608, %v557
        %v645 = vsel %vm637, %v610, %v561
        %v646 = vsel %vm637, %v612, %v565
        %v647 = vsel %vm637, %v614, %v569
        %658 = vrot.lane.b32.xlu0 %v482, 4
        %v659 = vpop.permute.xlu0 %658
        %660 = vrot.lane.b32.xlu0 %v483, 4
        %v661 = vpop.permute.xlu0 %660
        %662 = vrot.lane.b32.xlu0 %v484, 4
        %v663 = vpop.permute.xlu0 %662
        %664 = vrot.lane.b32.xlu0 %v485, 4
        %v665 = vpop.permute.xlu0 %664
        %666 = vrot.lane.b32.xlu0 %v486, 4
        %v667 = vpop.permute.xlu0 %666
        %668 = vrot.lane.b32.xlu0 %v487, 4
        %v669 = vpop.permute.xlu0 %668
        %670 = vrot.lane.b32.xlu0 %v488, 4
        %v671 = vpop.permute.xlu0 %670
        %672 = vrot.lane.b32.xlu0 %v489, 4
        %v673 = vpop.permute.xlu0 %672
        %674 = vrot.lane.b32.xlu0 %v490, 4
        %v675 = vpop.permute.xlu0 %674
        %676 = vrot.lane.b32.xlu0 %v491, 4
        %v677 = vpop.permute.xlu0 %676
        %688 = vrot.lane.b32.xlu0 %v638, 8
        %v689 = vpop.permute.xlu0 %688
        %690 = vrot.lane.b32.xlu0 %v639, 8
        %v691 = vpop.permute.xlu0 %690
        %692 = vrot.lane.b32.xlu0 %v640, 8
        %v693 = vpop.permute.xlu0 %692
        %694 = vrot.lane.b32.xlu0 %v641, 8
        %v695 = vpop.permute.xlu0 %694
        %696 = vrot.lane.b32.xlu0 %v642, 8
        %v697 = vpop.permute.xlu0 %696
        %698 = vrot.lane.b32.xlu0 %v643, 8
        %v699 = vpop.permute.xlu0 %698
        %700 = vrot.lane.b32.xlu0 %v644, 8
        %v701 = vpop.permute.xlu0 %700
        %702 = vrot.lane.b32.xlu0 %v645, 8
        %v703 = vpop.permute.xlu0 %702
        %704 = vrot.lane.b32.xlu0 %v646, 8
        %v705 = vpop.permute.xlu0 %704
        %706 = vrot.lane.b32.xlu0 %v647, 8
        %v707 = vpop.permute.xlu0 %706
        %vm708 = vcmask 31744
        %v711 = vsel %vm708, %v585, %v659
        %v714 = vsel %vm708, %v586, %v661
        %v717 = vsel %vm708, %v587, %v663
        %v720 = vsel %vm708, %v588, %v665
        %v723 = vsel %vm708, %v589, %v667
        %v726 = vsel %vm708, %v590, %v669
        %v729 = vsel %vm708, %v591, %v671
        %v732 = vsel %vm708, %v592, %v673
        %v735 = vsel %vm708, %v593, %v675
        %v738 = vsel %vm708, %v594, %v677
        %vm739 = vcmask 64512
        %v741 = vsel %vm739, %v711, %v689
        %v743 = vsel %vm739, %v714, %v691
        %v745 = vsel %vm739, %v717, %v693
        %v747 = vsel %vm739, %v720, %v695
        %v749 = vsel %vm739, %v723, %v697
        %v751 = vsel %vm739, %v726, %v699
        %v753 = vsel %vm739, %v729, %v701
        %v755 = vsel %vm739, %v732, %v703
        %v757 = vsel %vm739, %v735, %v705
        %v759 = vsel %vm739, %v738, %v707
        %v760 = vld [vmem:[%s3] sm:$0xf]
        %v761 = vld [vmem:[%s3 + $0x4] sm:$0x3]
        %s762 = scalar_lea.vmem %s3, 8
        %v763 = vld [vmem:[%s762] sm:$0xf]
        %v764 = vld [vmem:[%s762 + $0x4] sm:$0x3]
        %v767 = vunpack.c.l.b16 %v763
        %v768 = vunpack.c.l.b16 %v764
        %v769 = vpack.c.b16 %v768, %v767
        %vm770 = vcmask 97280
        %v771 = vsel %vm770, %v743, 0
        %v773 = vsel %vm770, %v745, 0
        %v775 = vsel %vm770, %v747, 0
        %v777 = vsel %vm770, %v749, 0
        %v779 = vsel %vm770, %v751, 0
        %v781 = vsel %vm770, %v753, 0
        %v783 = vsel %vm770, %v755, 0
        %v785 = vsel %vm770, %v757, 0
        %vm787 = vcmask 1045504
        %v789 = vsel %vm787, %v769, 0
        %791 = vmatprep.subr.bf16.mxu0 0
        %792 = vmatpush1.bf16.msra.mxu0 %v789
        %793 = vmatprep.subr.bf16.mxu0 0
        %794 = vmatpush1.bf16.msra.mxu0 0
        %795 = vmatprep.subr.bf16.mxu0 0
        %796 = vmatpush1.bf16.msra.mxu0 0
        %797 = vmatprep.subr.bf16.mxu0 0
        %798 = vmatpush1.bf16.msra.mxu0 0
        %799 = vmatprep.subr.bf16.mxu0 0
        %800 = vmatpush1.bf16.msra.mxu0 0
        %801 = vmatprep.subr.bf16.mxu0 0
        %802 = vmatpush1.bf16.msra.mxu0 0
        %803 = vmatprep.subr.bf16.mxu0 0
        %804 = vmatpush1.bf16.msra.mxu0 0
        %805 = vmatprep.subr.bf16.mxu0 0
        %806 = vmatpush1.bf16.msra.mxu0 0
        %807 = vmatprep.subr.bf16.mxu0 0
        %808 = vmatpush1.bf16.msra.mxu0 0
        %809 = vmatprep.subr.bf16.mxu0 0
        %810 = vmatpush1.bf16.msra.mxu0 0
        %811 = vmatprep.subr.bf16.mxu0 0
        %812 = vmatpush1.bf16.msra.mxu0 0
        %813 = vmatprep.subr.bf16.mxu0 0
        %814 = vmatpush1.bf16.msra.mxu0 0
        %815 = vmatprep.subr.bf16.mxu0 0
        %816 = vmatpush1.bf16.msra.mxu0 0
        %817 = vmatprep.subr.bf16.mxu0 0
        %818 = vmatpush1.bf16.msra.mxu0 0
        %819 = vmatprep.subr.bf16.mxu0 0
        %820 = vmatpush1.bf16.msra.mxu0 0
        %821 = vmatprep.subr.bf16.mxu0 0
        %822 = vmatpush1.bf16.msra.mxu0 0
        %823 = vmatprep.mubr.bf16.mxu0 0
        %824 = vmatmul.mubr.bf16.gmra.mrb[0].mxu0 %v771
        %v825 = vpop.f32.mrb[0].mxu0
        %v826 = vadd.f32 0.0, %v825
        %v827 = vpop.f32.mrb[0].mxu0
        %v828 = vpop.f32.mrb[0].mxu0
        %v829 = vadd.f32 0.0, %v828
        %v830 = vpop.f32.mrb[0].mxu0
        %831 = vmatprep.mubr.bf16.mxu0 0
        %832 = vmatmul.mubr.bf16.gmra.mrb[0].mxu0 %v773
        %v833 = vpop.f32.mrb[0].mxu0
        %v834 = vadd.f32 0.0, %v833
        %v835 = vpop.f32.mrb[0].mxu0
        %v836 = vpop.f32.mrb[0].mxu0
        %v837 = vadd.f32 0.0, %v836
        %v838 = vpop.f32.mrb[0].mxu0
        %839 = vmatprep.mubr.bf16.mxu0 0
        %840 = vmatmul.mubr.bf16.gmra.mrb[0].mxu0 %v775
        %v841 = vpop.f32.mrb[0].mxu0
        %v842 = vadd.f32 0.0, %v841
        %v843 = vpop.f32.mrb[0].mxu0
        %v844 = vpop.f32.mrb[0].mxu0
        %v845 = vadd.f32 0.0, %v844
        %v846 = vpop.f32.mrb[0].mxu0
        %847 = vmatprep.mubr.bf16.mxu0 0
        %848 = vmatmul.mubr.bf16.gmra.mrb[0].mxu0 %v777
        %v849 = vpop.f32.mrb[0].mxu0
        %v850 = vadd.f32 0.0, %v849
        %v851 = vpop.f32.mrb[0].mxu0
        %v852 = vpop.f32.mrb[0].mxu0
        %v853 = vadd.f32 0.0, %v852
        %v854 = vpop.f32.mrb[0].mxu0
        %855 = vmatprep.mubr.bf16.mxu0 0
        %856 = vmatmul.mubr.bf16.gmra.mrb[0].mxu0 %v779
        %v857 = vpop.f32.mrb[0].mxu0
        %v858 = vadd.f32 0.0, %v857
        %v859 = vpop.f32.mrb[0].mxu0
        %v860 = vpop.f32.mrb[0].mxu0
        %v861 = vadd.f32 0.0, %v860
        %v862 = vpop.f32.mrb[0].mxu0
        %863 = vmatprep.mubr.bf16.mxu0 0
        %864 = vmatmul.mubr.bf16.gmra.mrb[0].mxu0 %v781
        %v865 = vpop.f32.mrb[0].mxu0
        %v866 = vadd.f32 0.0, %v865
        %v867 = vpop.f32.mrb[0].mxu0
        %v868 = vpop.f32.mrb[0].mxu0
        %v869 = vadd.f32 0.0, %v868
        %v870 = vpop.f32.mrb[0].mxu0
        %871 = vmatprep.mubr.bf16.mxu0 0
        %872 = vmatmul.mubr.bf16.gmra.mrb[0].mxu0 %v783
        %v873 = vpop.f32.mrb[0].mxu0
        %v874 = vadd.f32 0.0, %v873
        %v875 = vpop.f32.mrb[0].mxu0
        %v876 = vpop.f32.mrb[0].mxu0
        %v877 = vadd.f32 0.0, %v876
        %v878 = vpop.f32.mrb[0].mxu0
        %879 = vmatprep.mubr.bf16.mxu0 0
        %880 = vmatmul.mubr.bf16.gmra.mrb[0].mxu0 %v785
        %v881 = vpop.f32.mrb[0].mxu0
        %v882 = vadd.f32 0.0, %v881
        %v883 = vpop.f32.mrb[0].mxu0
        %v884 = vpop.f32.mrb[0].mxu0
        %v885 = vadd.f32 0.0, %v884
        %v886 = vpop.f32.mrb[0].mxu0
        %887 = vdwg.mxu0
        %v890 = vunpack.c.l.b16 %v760
        %v891 = vunpack.c.l.b16 %v761
        %v892 = vpack.c.b16 %v891, %v890
        %v893 = vsel %vm770, %v741, 0
        %v896 = vsel %vm787, %v892, 0
        %898 = vmatprep.subr.bf16.mxu0 0
        %899 = vmatpush1.bf16.msra.mxu0 %v896
        %900 = vmatprep.subr.bf16.mxu0 0
        %901 = vmatpush1.bf16.msra.mxu0 0
        %902 = vmatprep.subr.bf16.mxu0 0
        %903 = vmatpush1.bf16.msra.mxu0 0
        %904 = vmatprep.subr.bf16.mxu0 0
        %905 = vmatpush1.bf16.msra.mxu0 0
        %906 = vmatprep.subr.bf16.mxu0 0
        %907 = vmatpush1.bf16.msra.mxu0 0
        %908 = vmatprep.subr.bf16.mxu0 0
        %909 = vmatpush1.bf16.msra.mxu0 0
        %910 = vmatprep.subr.bf16.mxu0 0
        %911 = vmatpush1.bf16.msra.mxu0 0
        %912 = vmatprep.subr.bf16.mxu0 0
        %913 = vmatpush1.bf16.msra.mxu0 0
        %914 = vmatprep.subr.bf16.mxu0 0
        %915 = vmatpush1.bf16.msra.mxu0 0
        %916 = vmatprep.subr.bf16.mxu0 0
        %917 = vmatpush1.bf16.msra.mxu0 0
        %918 = vmatprep.subr.bf16.mxu0 0
        %919 = vmatpush1.bf16.msra.mxu0 0
        %920 = vmatprep.subr.bf16.mxu0 0
        %921 = vmatpush1.bf16.msra.mxu0 0
        %922 = vmatprep.subr.bf16.mxu0 0
        %923 = vmatpush1.bf16.msra.mxu0 0
        %924 = vmatprep.subr.bf16.mxu0 0
        %925 = vmatpush1.bf16.msra.mxu0 0
        %926 = vmatprep.subr.bf16.mxu0 0
        %927 = vmatpush1.bf16.msra.mxu0 0
        %928 = vmatprep.subr.bf16.mxu0 0
        %929 = vmatpush1.bf16.msra.mxu0 0
        %930 = vmatprep.mubr.bf16.mxu0 0
        %931 = vmatmul.mubr.bf16.gmra.mrb[0].mxu0 %v893
        %v932 = vpop.f32.mrb[0].mxu0
        %v933 = vadd.f32 %v826, %v932
        %v934 = vpop.f32.mrb[0].mxu0
        %v935 = vpop.f32.mrb[0].mxu0
        %v936 = vadd.f32 %v829, %v935
        %v937 = vpop.f32.mrb[0].mxu0
        %938 = vmatprep.mubr.bf16.mxu0 0
        %939 = vmatmul.mubr.bf16.gmra.mrb[0].mxu0 %v771
        %v940 = vpop.f32.mrb[0].mxu0
        %v941 = vadd.f32 %v834, %v940
        %v942 = vpop.f32.mrb[0].mxu0
        %v943 = vpop.f32.mrb[0].mxu0
        %v944 = vadd.f32 %v837, %v943
        %v945 = vpop.f32.mrb[0].mxu0
        %946 = vmatprep.mubr.bf16.mxu0 0
        %947 = vmatmul.mubr.bf16.gmra.mrb[0].mxu0 %v773
        %v948 = vpop.f32.mrb[0].mxu0
        %v949 = vadd.f32 %v842, %v948
        %v950 = vpop.f32.mrb[0].mxu0
        %v951 = vpop.f32.mrb[0].mxu0
        %v952 = vadd.f32 %v845, %v951
        %v953 = vpop.f32.mrb[0].mxu0
        %954 = vmatprep.mubr.bf16.mxu0 0
        %955 = vmatmul.mubr.bf16.gmra.mrb[0].mxu0 %v775
        %v956 = vpop.f32.mrb[0].mxu0
        %v957 = vadd.f32 %v850, %v956
        %v958 = vpop.f32.mrb[0].mxu0
        %v959 = vpop.f32.mrb[0].mxu0
        %v960 = vadd.f32 %v853, %v959
        %v961 = vpop.f32.mrb[0].mxu0
        %962 = vmatprep.mubr.bf16.mxu0 0
        %963 = vmatmul.mubr.bf16.gmra.mrb[0].mxu0 %v777
        %v964 = vpop.f32.mrb[0].mxu0
        %v965 = vadd.f32 %v858, %v964
        %v966 = vpop.f32.mrb[0].mxu0
        %v967 = vpop.f32.mrb[0].mxu0
        %v968 = vadd.f32 %v861, %v967
        %v969 = vpop.f32.mrb[0].mxu0
        %970 = vmatprep.mubr.bf16.mxu0 0
        %971 = vmatmul.mubr.bf16.gmra.mrb[0].mxu0 %v779
        %v972 = vpop.f32.mrb[0].mxu0
        %v973 = vadd.f32 %v866, %v972
        %v974 = vpop.f32.mrb[0].mxu0
        %v975 = vpop.f32.mrb[0].mxu0
        %v976 = vadd.f32 %v869, %v975
        %v977 = vpop.f32.mrb[0].mxu0
        %978 = vmatprep.mubr.bf16.mxu0 0
        %979 = vmatmul.mubr.bf16.gmra.mrb[0].mxu0 %v781
        %v980 = vpop.f32.mrb[0].mxu0
        %v981 = vadd.f32 %v874, %v980
        %v982 = vpop.f32.mrb[0].mxu0
        %v983 = vpop.f32.mrb[0].mxu0
        %v984 = vadd.f32 %v877, %v983
        %v985 = vpop.f32.mrb[0].mxu0
        %986 = vmatprep.mubr.bf16.mxu0 0
        %987 = vmatmul.mubr.bf16.gmra.mrb[0].mxu0 %v783
        %v988 = vpop.f32.mrb[0].mxu0
        %v989 = vadd.f32 %v882, %v988
        %v990 = vpop.f32.mrb[0].mxu0
        %v991 = vpop.f32.mrb[0].mxu0
        %v992 = vadd.f32 %v885, %v991
        %v993 = vpop.f32.mrb[0].mxu0
        %994 = vdwg.mxu0
        %s995 = scalar_lea.vmem %s3, 16
        %v996 = vld [vmem:[%s995] sm:$0xf]
        %v997 = vld [vmem:[%s995 + $0x4] sm:$0x3]
        %v1000 = vunpack.c.l.b16 %v996
        %v1001 = vunpack.c.l.b16 %v997
        %v1002 = vpack.c.b16 %v1001, %v1000
        %v1003 = vsel %vm770, %v759, 0
        %v1006 = vsel %vm787, %v1002, 0
        %1008 = vmatprep.subr.bf16.mxu0 0
        %1009 = vmatpush1.bf16.msra.mxu0 %v1006
        %1010 = vmatprep.subr.bf16.mxu0 0
        %1011 = vmatpush1.bf16.msra.mxu0 0
        %1012 = vmatprep.subr.bf16.mxu0 0
        %1013 = vmatpush1.bf16.msra.mxu0 0
        %1014 = vmatprep.subr.bf16.mxu0 0
        %1015 = vmatpush1.bf16.msra.mxu0 0
        %1016 = vmatprep.subr.bf16.mxu0 0
        %1017 = vmatpush1.bf16.msra.mxu0 0
        %1018 = vmatprep.subr.bf16.mxu0 0
        %1019 = vmatpush1.bf16.msra.mxu0 0
        %1020 = vmatprep.subr.bf16.mxu0 0
        %1021 = vmatpush1.bf16.msra.mxu0 0
        %1022 = vmatprep.subr.bf16.mxu0 0
        %1023 = vmatpush1.bf16.msra.mxu0 0
        %1024 = vmatprep.subr.bf16.mxu0 0
        %1025 = vmatpush1.bf16.msra.mxu0 0
        %1026 = vmatprep.subr.bf16.mxu0 0
        %1027 = vmatpush1.bf16.msra.mxu0 0
        %1028 = vmatprep.subr.bf16.mxu0 0
        %1029 = vmatpush1.bf16.msra.mxu0 0
        %1030 = vmatprep.subr.bf16.mxu0 0
        %1031 = vmatpush1.bf16.msra.mxu0 0
        %1032 = vmatprep.subr.bf16.mxu0 0
        %1033 = vmatpush1.bf16.msra.mxu0 0
        %1034 = vmatprep.subr.bf16.mxu0 0
        %1035 = vmatpush1.bf16.msra.mxu0 0
        %1036 = vmatprep.subr.bf16.mxu0 0
        %1037 = vmatpush1.bf16.msra.mxu0 0
        %1038 = vmatprep.subr.bf16.mxu0 0
        %1039 = vmatpush1.bf16.msra.mxu0 0
        %1040 = vmatprep.mubr.bf16.mxu0 0
        %1041 = vmatmul.mubr.bf16.gmra.mrb[0].mxu0 %v773
        %v1042 = vpop.f32.mrb[0].mxu0
        %v1043 = vadd.f32 0.0, %v1042
        %v1044 = vpop.f32.mrb[0].mxu0
        %v1045 = vpop.f32.mrb[0].mxu0
        %v1046 = vadd.f32 0.0, %v1045
        %v1047 = vpop.f32.mrb[0].mxu0
        %1048 = vmatprep.mubr.bf16.mxu0 0
        %1049 = vmatmul.mubr.bf16.gmra.mrb[0].mxu0 %v775
        %v1050 = vpop.f32.mrb[0].mxu0
        %v1051 = vadd.f32 0.0, %v1050
        %v1052 = vpop.f32.mrb[0].mxu0
        %v1053 = vpop.f32.mrb[0].mxu0
        %v1054 = vadd.f32 0.0, %v1053
        %v1055 = vpop.f32.mrb[0].mxu0
        %1056 = vmatprep.mubr.bf16.mxu0 0
        %1057 = vmatmul.mubr.bf16.gmra.mrb[0].mxu0 %v777
        %v1058 = vpop.f32.mrb[0].mxu0
        %v1059 = vadd.f32 0.0, %v1058
        %v1060 = vpop.f32.mrb[0].mxu0
        %v1061 = vpop.f32.mrb[0].mxu0
        %v1062 = vadd.f32 0.0, %v1061
        %v1063 = vpop.f32.mrb[0].mxu0
        %1064 = vmatprep.mubr.bf16.mxu0 0
        %1065 = vmatmul.mubr.bf16.gmra.mrb[0].mxu0 %v779
        %v1066 = vpop.f32.mrb[0].mxu0
        %v1067 = vadd.f32 0.0, %v1066
        %v1068 = vpop.f32.mrb[0].mxu0
        %v1069 = vpop.f32.mrb[0].mxu0
        %v1070 = vadd.f32 0.0, %v1069
        %v1071 = vpop.f32.mrb[0].mxu0
        %1072 = vmatprep.mubr.bf16.mxu0 0
        %1073 = vmatmul.mubr.bf16.gmra.mrb[0].mxu0 %v781
        %v1074 = vpop.f32.mrb[0].mxu0
        %v1075 = vadd.f32 0.0, %v1074
        %v1076 = vpop.f32.mrb[0].mxu0
        %v1077 = vpop.f32.mrb[0].mxu0
        %v1078 = vadd.f32 0.0, %v1077
        %v1079 = vpop.f32.mrb[0].mxu0
        %1080 = vmatprep.mubr.bf16.mxu0 0
        %1081 = vmatmul.mubr.bf16.gmra.mrb[0].mxu0 %v783
        %v1082 = vpop.f32.mrb[0].mxu0
        %v1083 = vadd.f32 0.0, %v1082
        %v1084 = vpop.f32.mrb[0].mxu0
        %v1085 = vpop.f32.mrb[0].mxu0
        %v1086 = vadd.f32 0.0, %v1085
        %v1087 = vpop.f32.mrb[0].mxu0
        %1088 = vmatprep.mubr.bf16.mxu0 0
        %1089 = vmatmul.mubr.bf16.gmra.mrb[0].mxu0 %v785
        %v1090 = vpop.f32.mrb[0].mxu0
        %v1091 = vadd.f32 0.0, %v1090
        %v1092 = vpop.f32.mrb[0].mxu0
        %v1093 = vpop.f32.mrb[0].mxu0
        %v1094 = vadd.f32 0.0, %v1093
        %v1095 = vpop.f32.mrb[0].mxu0
        %1096 = vmatprep.mubr.bf16.mxu0 0
        %1097 = vmatmul.mubr.bf16.gmra.mrb[0].mxu0 %v1003
        %v1098 = vpop.f32.mrb[0].mxu0
        %v1099 = vadd.f32 0.0, %v1098
        %v1100 = vpop.f32.mrb[0].mxu0
        %v1101 = vpop.f32.mrb[0].mxu0
        %v1102 = vadd.f32 0.0, %v1101
        %v1103 = vpop.f32.mrb[0].mxu0
        %1104 = vdwg.mxu0
        %v1105 = vadd.f32 %v933, %v1043
        %v1106 = vadd.f32 %v936, %v1046
        %v1107 = vadd.f32 %v941, %v1051
        %v1108 = vadd.f32 %v944, %v1054
        %v1109 = vadd.f32 %v949, %v1059
        %v1110 = vadd.f32 %v952, %v1062
        %v1111 = vadd.f32 %v957, %v1067
        %v1112 = vadd.f32 %v960, %v1070
        %v1113 = vadd.f32 %v965, %v1075
        %v1114 = vadd.f32 %v968, %v1078
        %v1115 = vadd.f32 %v973, %v1083
        %v1116 = vadd.f32 %v976, %v1086
        %v1117 = vadd.f32 %v981, %v1091
        %v1118 = vadd.f32 %v984, %v1094
        %v1119 = vadd.f32 %v989, %v1099
        %v1120 = vadd.f32 %v992, %v1102
        %v1121 = vld [vmem:[%s4] sm:$0x1]
        %v1123 = vlaneseq
        %v1124 = vshrl.u32 %v1123, 7
        %v1125 = vsub.s32 0, %v1124
        %v1126 = vrot.slane %v1121, %v1125
        %v1128 = vadd.f32 %v1105, %v1126
        %v1129 = vadd.f32 %v1106, %v1126
        %v1130 = vadd.f32 %v1107, %v1126
        %v1131 = vadd.f32 %v1108, %v1126
        %v1132 = vadd.f32 %v1109, %v1126
        %v1133 = vadd.f32 %v1110, %v1126
        %v1134 = vadd.f32 %v1111, %v1126
        %v1135 = vadd.f32 %v1112, %v1126
        %v1136 = vadd.f32 %v1113, %v1126
        %v1137 = vadd.f32 %v1114, %v1126
        %v1138 = vadd.f32 %v1115, %v1126
        %v1139 = vadd.f32 %v1116, %v1126
        %v1140 = vadd.f32 %v1117, %v1126
        %v1141 = vadd.f32 %v1118, %v1126
        %v1142 = vadd.f32 %v1119, %v1126
        %v1143 = vadd.f32 %v1120, %v1126
        %v1144 = vpack.c.bf16 %v1129, %v1128
        %v1145 = vpack.c.bf16 %v1131, %v1130
        %v1146 = vpack.c.bf16 %v1133, %v1132
        %v1147 = vpack.c.bf16 %v1135, %v1134
        %v1148 = vpack.c.bf16 %v1137, %v1136
        %v1149 = vpack.c.bf16 %v1139, %v1138
        %v1150 = vpack.c.bf16 %v1141, %v1140
        %v1151 = vpack.c.bf16 %v1143, %v1142
        %v1160 = vunpack.c.l.b16 %v1144
        %v1161 = vunpack.c.h.b16 %v1144
        %v1162 = vunpack.c.l.b16 %v1145
        %v1163 = vunpack.c.h.b16 %v1145
        %v1164 = vunpack.c.l.b16 %v1146
        %v1165 = vunpack.c.h.b16 %v1146
        %v1166 = vunpack.c.l.b16 %v1147
        %v1167 = vunpack.c.h.b16 %v1147
        %v1168 = vunpack.c.l.b16 %v1148
        %v1169 = vunpack.c.h.b16 %v1148
        %v1170 = vunpack.c.l.b16 %v1149
        %v1171 = vunpack.c.h.b16 %v1149
        %v1172 = vunpack.c.l.b16 %v1150
        %v1173 = vunpack.c.h.b16 %v1150
        %v1174 = vunpack.c.l.b16 %v1151
        %v1175 = vunpack.c.h.b16 %v1151
        %v1176 = vpack.c.b16 %v1160, %v1160
        %v1177 = vpack.c.b16 %v1161, %v1161
        %v1178 = vpack.c.b16 %v1162, %v1162
        %v1179 = vpack.c.b16 %v1163, %v1163
        %v1180 = vpack.c.b16 %v1164, %v1164
        %v1181 = vpack.c.b16 %v1165, %v1165
        %v1182 = vpack.c.b16 %v1166, %v1166
        %v1183 = vpack.c.b16 %v1167, %v1167
        %v1184 = vpack.c.b16 %v1168, %v1168
        %v1185 = vpack.c.b16 %v1169, %v1169
        %v1186 = vpack.c.b16 %v1170, %v1170
        %v1187 = vpack.c.b16 %v1171, %v1171
        %v1188 = vpack.c.b16 %v1172, %v1172
        %v1189 = vpack.c.b16 %v1173, %v1173
        %v1190 = vpack.c.b16 %v1174, %v1174
        %v1191 = vpack.c.b16 %v1175, %v1175
        %vm1208 = vcmask 27648
        %1209 = vst.msk [vmem:[%s459] sm:$0xf] %vm1208, %v1176
        %1210 = vst.msk [vmem:[%s459 + $0x4] sm:$0xf] %vm1208, %v1177
        %1211 = vst.msk [vmem:[%s459 + $0x8] sm:$0xf] %vm1208, %v1178
        %1212 = vst.msk [vmem:[%s459 + $0xc] sm:$0xf] %vm1208, %v1179
        %1213 = vst.msk [vmem:[%s459 + $0x10] sm:$0xf] %vm1208, %v1180
        %1214 = vst.msk [vmem:[%s459 + $0x14] sm:$0xf] %vm1208, %v1181
        %1215 = vst.msk [vmem:[%s459 + $0x18] sm:$0xf] %vm1208, %v1182
        %1216 = vst.msk [vmem:[%s459 + $0x1c] sm:$0xf] %vm1208, %v1183
        %1217 = vst.msk [vmem:[%s459 + $0x20] sm:$0xf] %vm1208, %v1184
        %1218 = vst.msk [vmem:[%s459 + $0x24] sm:$0xf] %vm1208, %v1185
        %1219 = vst.msk [vmem:[%s459 + $0x28] sm:$0xf] %vm1208, %v1186
        %1220 = vst.msk [vmem:[%s459 + $0x2c] sm:$0xf] %vm1208, %v1187
        %1221 = vst.msk [vmem:[%s459 + $0x30] sm:$0xf] %vm1208, %v1188
        %1222 = vst.msk [vmem:[%s459 + $0x34] sm:$0xf] %vm1208, %v1189
        %1223 = vst.msk [vmem:[%s459 + $0x38] sm:$0xf] %vm1208, %v1190
        %1224 = vst.msk [vmem:[%s459 + $0x3c] sm:$0xf] %vm1208, %v1191
        %v1225 = vsel %vm708, %v1128, 0.0
        %v1226 = vsel %vm708, %v1129, 0.0
        %v1227 = vadd.f32 %v1225, %v1226
        %v1228 = vsel %vm708, %v1130, 0.0
        %v1229 = vadd.f32 %v1227, %v1228
        %v1230 = vsel %vm708, %v1131, 0.0
        %v1231 = vadd.f32 %v1229, %v1230
        %v1232 = vsel %vm708, %v1132, 0.0
        %v1233 = vadd.f32 %v1231, %v1232
        %v1234 = vsel %vm708, %v1133, 0.0
        %v1235 = vadd.f32 %v1233, %v1234
        %v1236 = vsel %vm708, %v1134, 0.0
        %v1237 = vadd.f32 %v1235, %v1236
        %v1238 = vsel %vm708, %v1135, 0.0
        %v1239 = vadd.f32 %v1237, %v1238
        %v1240 = vsel %vm708, %v1136, 0.0
        %v1241 = vadd.f32 %v1239, %v1240
        %v1242 = vsel %vm708, %v1137, 0.0
        %v1243 = vadd.f32 %v1241, %v1242
        %v1244 = vsel %vm708, %v1138, 0.0
        %v1245 = vadd.f32 %v1243, %v1244
        %v1246 = vsel %vm708, %v1139, 0.0
        %v1247 = vadd.f32 %v1245, %v1246
        %v1248 = vsel %vm708, %v1140, 0.0
        %v1249 = vadd.f32 %v1247, %v1248
        %v1250 = vsel %vm708, %v1141, 0.0
        %v1251 = vadd.f32 %v1249, %v1250
        %v1252 = vsel %vm708, %v1142, 0.0
        %v1253 = vadd.f32 %v1251, %v1252
        %v1254 = vsel %vm708, %v1143, 0.0
        %v1255 = vadd.f32 %v1253, %v1254
        %v1256 = vrot.slane %v1255, 4
        %v1257 = vadd.f32 %v1255, %v1256
        %v1258 = vrot.slane %v1257, 2
        %v1259 = vadd.f32 %v1257, %v1258
        %v1260 = vrot.slane %v1259, 1
        %v1261 = vadd.f32 %v1259, %v1260
        %v1262 = vmul.f32 %v1128, %v1128
        %v1263 = vmul.f32 %v1129, %v1129
        %v1264 = vmul.f32 %v1130, %v1130
        %v1265 = vmul.f32 %v1131, %v1131
        %v1266 = vmul.f32 %v1132, %v1132
        %v1267 = vmul.f32 %v1133, %v1133
        %v1268 = vmul.f32 %v1134, %v1134
        %v1269 = vmul.f32 %v1135, %v1135
        %v1270 = vmul.f32 %v1136, %v1136
        %v1271 = vmul.f32 %v1137, %v1137
        %v1272 = vmul.f32 %v1138, %v1138
        %v1273 = vmul.f32 %v1139, %v1139
        %v1274 = vmul.f32 %v1140, %v1140
        %v1275 = vmul.f32 %v1141, %v1141
        %v1276 = vmul.f32 %v1142, %v1142
        %v1277 = vmul.f32 %v1143, %v1143
        %v1278 = vsel %vm708, %v1262, 0.0
        %v1279 = vsel %vm708, %v1263, 0.0
        %v1280 = vadd.f32 %v1278, %v1279
        %v1281 = vsel %vm708, %v1264, 0.0
        %v1282 = vadd.f32 %v1280, %v1281
        %v1283 = vsel %vm708, %v1265, 0.0
        %v1284 = vadd.f32 %v1282, %v1283
        %v1285 = vsel %vm708, %v1266, 0.0
        %v1286 = vadd.f32 %v1284, %v1285
        %v1287 = vsel %vm708, %v1267, 0.0
        %v1288 = vadd.f32 %v1286, %v1287
        %v1289 = vsel %vm708, %v1268, 0.0
        %v1290 = vadd.f32 %v1288, %v1289
        %v1291 = vsel %vm708, %v1269, 0.0
        %v1292 = vadd.f32 %v1290, %v1291
        %v1293 = vsel %vm708, %v1270, 0.0
        %v1294 = vadd.f32 %v1292, %v1293
        %v1295 = vsel %vm708, %v1271, 0.0
        %v1296 = vadd.f32 %v1294, %v1295
        %v1297 = vsel %vm708, %v1272, 0.0
        %v1298 = vadd.f32 %v1296, %v1297
        %v1299 = vsel %vm708, %v1273, 0.0
        %v1300 = vadd.f32 %v1298, %v1299
        %v1301 = vsel %vm708, %v1274, 0.0
        %v1302 = vadd.f32 %v1300, %v1301
        %v1303 = vsel %vm708, %v1275, 0.0
        %v1304 = vadd.f32 %v1302, %v1303
        %v1305 = vsel %vm708, %v1276, 0.0
        %v1306 = vadd.f32 %v1304, %v1305
        %v1307 = vsel %vm708, %v1277, 0.0
        %v1308 = vadd.f32 %v1306, %v1307
        %v1309 = vrot.slane %v1308, 4
        %v1310 = vadd.f32 %v1308, %v1309
        %v1311 = vrot.slane %v1310, 2
        %v1312 = vadd.f32 %v1310, %v1311
        %v1313 = vrot.slane %v1312, 1
        %v1314 = vadd.f32 %v1312, %v1313
        %vm1315 = vcmask 1040384
        %v1316 = vsel %vm1315, %v1261, %v1314
        %vm1317 = vcmask 25600
        %1318 = vst.msk [vmem:[%s396] sm:$0x3] %vm1317, %v1316
        %s1319 = smul.u32 8, %s26
        %p1320 = scmp.lt.s32.totalorder %s25, 1
        %s1321 = scalar_select %p1320, %s25, 1
        %p1322 = scmp.lt.s32.totalorder %s1319, 15
        %s1323 = scalar_select %p1322, %s1319, 15
        %s1324 = smul.addr %s1323, 2
        %s1325 = smul.addr %s1321, 32
        %s1326 = sadd.s32 %s1324, %s1325
        %s1327 = smul.addr %s1326, 4
        %s1328 = scalar_lea.vmem %s5, %s1327
        %s1329 = sand.u32 %s221, 1
        %s1330 = scalar_lea.sflag [#allocation3], %s1329
        %s1331 = sand.u32 %s221, 1
        %s1332 = smul.addr %s1331, 2
        %s1333 = scalar_lea.vmem [#allocation2], %s1332
        // Predicated region
        $region41: #{tpu_custom_call.1} parent=39 // pred_check
          %p1334 = pneg %p203
        $region42: #{tpu_custom_call.1} parent=39 // pred_check_branch
          %1336 = sbr.rel (%p1334) target = $region44
        $region43: #{tpu_custom_call.1} parent=39 // pred_region
          %s1337 = smul.u32 8, %s26
        $region44: #{tpu_custom_call.1} parent=39 // pred_fallthru
          _
        // Predicated region
        $region45: #{tpu_custom_call.1} parent=39 // pred_check
          %p1338 = pneg %p231
        $region46: #{tpu_custom_call.1} parent=39 // pred_check_branch
          %1340 = sbr.rel (%p1338) target = $region48
        $region47: #{tpu_custom_call.1} parent=39 // pred_region
          %s1342 = ssub.s32 32, 32
          %1343 = vsyncadd %s1330, %s1342
          %s1344 = smul.addr %s25, 2
          %s1345 = sadd.s32 %s26, %s1344
          %s1346 = smul.addr %s1345, 32
          %s1347 = scalar_lea.hbm %s6, %s1346
          %s1349 = sshll.u32 %s1333, 4
          %s1350 = int_to_ptr.vmem [resolvable:$true] %s1349
          %1352 = dma.vmem_to_hbm [thread:$0]  %s1350, 32, %s1347, %s1330
        $region48: #{tpu_custom_call.1} parent=39 // pred_fallthru
          _
      $region40: #{tpu_custom_call.1} parent=5 // pred_fallthru
        _
      %p1353 = scmp.le.s32.totalorder 2, %s16
      // Predicated region
      $region49: #{tpu_custom_call.1} parent=5 // pred_check
        %p1354 = pneg %p1353
      $region50: #{tpu_custom_call.1} parent=5 // pred_check_branch
        %1356 = sbr.rel (%p1354) target = $region52
      $region51: #{tpu_custom_call.1} parent=5 // pred_region
        %s1357 = ssub.s32 %s16, 2
        // Predicated region
        $region53: #{tpu_custom_call.1} parent=51 // pred_check
          %p1358 = pneg %p209
        $region54: #{tpu_custom_call.1} parent=51 // pred_check_branch
          %1360 = sbr.rel (%p1358) target = $region56
        $region55: #{tpu_custom_call.1} parent=51 // pred_region
          %s1361 = smul.u32 8, %s28
          %p1362 = scmp.lt.s32.totalorder %s27, 1
          %s1363 = scalar_select %p1362, %s27, 1
          %p1364 = scmp.lt.s32.totalorder %s1361, 15
          %s1365 = scalar_select %p1364, %s1361, 15
          %s1366 = smul.addr %s1365, 2
          %s1367 = smul.addr %s1363, 32
          %s1368 = sadd.s32 %s1366, %s1367
          %s1369 = smul.addr %s1368, 4
          %s1370 = scalar_lea.vmem %s5, %s1369
        $region56: #{tpu_custom_call.1} parent=51 // pred_fallthru
          _
        // Predicated region
        $region57: #{tpu_custom_call.1} parent=51 // pred_check
          %p1371 = pneg %p237
        $region58: #{tpu_custom_call.1} parent=51 // pred_check_branch
          %1373 = sbr.rel (%p1371) target = $region60
        $region59: #{tpu_custom_call.1} parent=51 // pred_region
          %s1374 = sand.u32 %s222, 1
          %s1375 = scalar_lea.sflag [#allocation3], %s1374
          %s1376 = sand.u32 %s222, 1
          %s1377 = smul.addr %s1376, 2
          %s1378 = scalar_lea.vmem [#allocation2], %s1377
          %1379 = dma.done %s1375, 32
        $region60: #{tpu_custom_call.1} parent=51 // pred_fallthru
          _
      $region52: #{tpu_custom_call.1} parent=5 // pred_fallthru
        _
    $region6: #{tpu_custom_call.1} parent=1 // loop_footer
      %s20 = sadd.s32 1, %s16
    $region7: #{tpu_custom_call.1} parent=1 // loop_footer_branch
      %15 = sbr.rel target = $region3
    $region8: #{tpu_custom_call.1} parent=1 // loop_exit
      _
    %1380 = vsyncpa [#allocation3], 1
    %s1381 = scalar_lea.sflag [#allocation3], 1
    %1382 = vsyncpa %s1381, 1

</llo_original>
